<compile_context>
chip_gen: v5e
topology: v5e:2x2
jax: 0.10.0
libtpu: 0.0.40
codegen_flags: <defaults>
</compile_context>

<pallas_src>
import functools

import jax
import jax.numpy as jnp
from jax.experimental import pallas as pl
from jax.experimental.pallas import tpu as pltpu


_BN_EPS = 1e-5
_LRELU_SLOPE = 0.2


# --------------------------------------------------------------------------- fused kernel


def _make_dgcn_kernel(lane_shifts, chans, num_lanes):
    """Fused DGCN forward; activations are (channels, batch*num_nodes) lane-dense tiles."""
    c1, c2, c3, c4 = chans
    L = num_lanes
    K = len(lane_shifts)

    # Static row offsets of each layer's (gamma, beta) segment in the packed table.
    off_a0, off_b0 = 0, c1
    off_1 = 2 * c1
    off_2 = off_1 + 2 * c2
    off_3 = off_2 + 2 * c3
    off_4 = off_3 + 2 * c4
    off_bias = off_4 + 8

    def lrelu(z):
        return jnp.maximum(z, _LRELU_SLOPE * z)            # LeakyReLU(0.2), one vmax

    def bn_lrelu(y, gamma, beta):
        # GraphBatchNorm1d (training mode): per-channel stats over every node column,
        # biased variance, eps=1e-5.  Two-pass variance for numerical safety.
        mean = jnp.mean(y, axis=1, keepdims=True)
        cen = y - mean
        var = jnp.mean(cen * cen, axis=1, keepdims=True)
        return lrelu(cen * (gamma * jax.lax.rsqrt(var + _BN_EPS)) + beta)

    def neighbor_max(h):
        # Max over ring neighbors.  Lane index = node*B + graph, so a lane roll by o*B
        # is a per-graph ring shift (symmetric offset set -> direction irrelevant).
        m = pltpu.roll(h, lane_shifts[0], 1)
        for s in lane_shifts[1:]:
            m = jnp.maximum(m, pltpu.roll(h, s, 1))
        return m

    def edge_bn_lrelu_max(zb, gamma, beta):
        # Layer-0 "b" branch.  The Linear has no bias, so
        # Linear(x[nbr] - x[ctr]) == z[nbr] - z[ctr] with z = W0b @ x.  The K edge
        # differences are built once as lane rolls, cached, and reused for the edge
        # statistics (over all B*N*K edges), the normalization and the per-center max.
        diffs = [pltpu.roll(zb, s, 1) - zb for s in lane_shifts]
        inv = 1.0 / float(L * K)
        s1 = jnp.zeros((zb.shape[0], 1), jnp.float32)
        for d in diffs:
            s1 = s1 + jnp.sum(d, axis=1, keepdims=True)
        mean = s1 * inv
        s2 = jnp.zeros_like(s1)
        for d in diffs:                                     # two-pass variance
            cen = d - mean
            s2 = s2 + jnp.sum(cen * cen, axis=1, keepdims=True)
        scale = gamma * jax.lax.rsqrt(s2 * inv + _BN_EPS)
        shift = beta - mean * scale
        m = None
        for d in diffs:
            t = lrelu(d * scale + shift)
            m = t if m is None else jnp.maximum(m, t)
        return m

    def mxu_dot(a, b):
        return jnp.dot(a, b, preferred_element_type=jnp.float32)

    def kernel(x_ref, w0_ref, w1_ref, w2_ref, w3_ref, w4_ref, gb_ref, out_ref):
        def gamma_beta(off, c):
            return gb_ref[off:off + c, 0:1], gb_ref[off:off + c, 1:2]

        x = x_ref[...]                                      # (nf0, L)

        # ---- layer 0: fused a/b matmul; node-BN for "a", edge-BN+max for "b" --------
        z0 = mxu_dot(w0_ref[...], x)                        # (2*c1, L)
        ga0, ba0 = gamma_beta(off_a0, c1)
        gb0, bb0 = gamma_beta(off_b0, c1)
        x0 = bn_lrelu(z0[:c1], ga0, ba0) + edge_bn_lrelu_max(z0[c1:], gb0, bb0)

        # ---- layers 1..3: fused a/b matmul + one combined per-channel BN pass -------
        def node_layer(xin, w_ref, off, cout):
            h = bn_lrelu(mxu_dot(w_ref[...], xin), *gamma_beta(off, 2 * cout))
            return h[:cout] + neighbor_max(h[cout:])        # 8-aligned sublane split

        x1 = node_layer(x0, w1_ref, off_1, c2)
        x2 = node_layer(x1, w2_ref, off_2, c3)
        x3 = node_layer(x2, w3_ref, off_3, c4)

        # ---- final projection: one matmul on the sublane-concatenated features ------
        x_cat = jnp.concatenate([x0, x1, x2, x3], axis=0)   # (c1+c2+c3+c4, L)
        y = mxu_dot(w4_ref[...], x_cat)                     # (8, L), rows identical
        y = bn_lrelu(y, *gamma_beta(off_4, 8))
        out_ref[...] = y + gb_ref[off_bias:off_bias + 8, 0:1]   # y = x4 + self.bias

    return kernel


# --------------------------------------------------------------------------- wrapper


@functools.partial(jax.jit, static_argnames=("ring_offsets",))
def dgcn_forward(x, params, *, ring_offsets):
    """DGCN.forward: x is (batch, channels, num_nodes) -> (batch*num_nodes, 1)."""
    batch, channel, num_nodes = x.shape
    num_lanes = batch * num_nodes

    offs = tuple(int(o) % num_nodes for o in ring_offsets)
    # The in-kernel lane-roll aggregation visits the neighbor set {n - o}; it matches
    # the reference's {n + o} only for a symmetric offset set, so enforce that.
    assert set(offs) == {(-o) % num_nodes for o in offs}, \
        "ring_offsets must form a symmetric neighbor set"
    lane_shifts = tuple((o * batch) % num_lanes for o in offs)

    # Lane-dense transposed layout: X[c, n*batch + b] = x[b, c, n].  Interleaving the
    # graph id into the lane index makes a global lane roll by o*batch an exact
    # per-graph ring shift (no seam handling needed).
    xt = jnp.transpose(x, (1, 2, 0)).reshape(channel, num_lanes)

    c1 = params["mlp0a"]["w"].shape[0]
    c2 = params["mlp1a"]["w"].shape[0]
    c3 = params["mlp2a"]["w"].shape[0]
    c4 = params["mlp3a"]["w"].shape[0]

    # Stack each layer's a/b Linear weights into one (2*Cout, Cin) matrix (single MXU
    # dot per layer); replicate the 1-row final weight to 8 rows so the last matmul is
    # sublane-aligned and the output store is a full (8,128)-tile unmasked store.
    w0 = jnp.concatenate([params["mlp0a"]["w"], params["mlp0b"]["w"]], axis=0)
    w1 = jnp.concatenate([params["mlp1a"]["w"], params["mlp1b"]["w"]], axis=0)
    w2 = jnp.concatenate([params["mlp2a"]["w"], params["mlp2b"]["w"]], axis=0)
    w3 = jnp.concatenate([params["mlp3a"]["w"], params["mlp3b"]["w"]], axis=0)
    w4 = jnp.broadcast_to(params["mlp4_cat"]["w"], (8, c1 + c2 + c3 + c4))

    # Pack every gamma/beta (plus the final scalar bias) into ONE (P, 2) table:
    # column 0 = gamma, column 1 = beta.  One DMA instead of ~25 tiny ones.
    gam, bet = [], []
    for name in ("mlp0a", "mlp0b", "mlp1a", "mlp1b",
                 "mlp2a", "mlp2b", "mlp3a", "mlp3b"):
        gam.append(params[name]["gamma"].reshape(-1))
        bet.append(params[name]["beta"].reshape(-1))
    gam.append(jnp.broadcast_to(params["mlp4_cat"]["gamma"].reshape(-1), (8,)))
    bet.append(jnp.broadcast_to(params["mlp4_cat"]["beta"].reshape(-1), (8,)))
    gam.append(jnp.broadcast_to(params["bias"].reshape(-1), (8,)))   # + self.bias rows
    bet.append(jnp.zeros((8,), jnp.float32))
    gb_pack = jnp.stack([jnp.concatenate(gam), jnp.concatenate(bet)], axis=1)

    kernel = _make_dgcn_kernel(lane_shifts, (c1, c2, c3, c4), num_lanes)

    # No grid: whole arrays live in VMEM for a single invocation (default whole-array
    # specs), so there is no double-buffering or per-step pipeline overhead.
    out = pl.pallas_call(
        kernel,
        out_shape=jax.ShapeDtypeStruct((8, num_lanes), jnp.float32),
    )(xt, w0, w1, w2, w3, w4, gb_pack)

    # lane n*batch + b  ->  module row b*num_nodes + n, as a (B*N, 1) column
    return out[0].reshape(num_nodes, batch).T.reshape(num_lanes, 1)


# --------------------------------------------------------------------------- graph + params


def make_edge_index(num_nodes, ring_offsets):
    """Deterministic symmetric K-regular ring graph; centers sorted, K edges/center."""
    offs = jnp.asarray(ring_offsets, dtype=jnp.int32)
    nodes = jnp.arange(num_nodes, dtype=jnp.int32)
    centers = jnp.repeat(nodes, offs.shape[0])
    neighbors = ((nodes[:, None] + offs[None, :]) % num_nodes).reshape(-1)
    return centers, neighbors


def init_params(key, nf):
    cat_c = nf[1] + nf[2] + nf[3] + nf[4]
    layer_dims = [
        ("mlp0a", nf[0], nf[1]), ("mlp0b", nf[0], nf[1]),
        ("mlp1a", nf[1], nf[2]), ("mlp1b", nf[1], nf[2]),
        ("mlp2a", nf[2], nf[3]), ("mlp2b", nf[2], nf[3]),
        ("mlp3a", nf[3], nf[4]), ("mlp3b", nf[3], nf[4]),
        ("mlp4_cat", cat_c, 1),
    ]
    params = {}
    keys = jax.random.split(key, len(layer_dims))
    for k, (name, cin, cout) in zip(keys, layer_dims):
        w = jax.random.normal(k, (cout, cin), jnp.float32) / jnp.sqrt(jnp.float32(cin))
        params[name] = {
            "w": w,                                      # (Cout, Cin) == nn.Linear.weight
            "gamma": jnp.ones((1, cout), jnp.float32),   # BatchNorm1d.reset_parameters()
            "beta": jnp.zeros((1, cout), jnp.float32),
        }
    params["bias"] = jnp.zeros((1, 1), jnp.float32)      # zeros(self.bias)
    return params


# --------------------------------------------------------------------------- pure-JAX reference


def dgcn_reference(x, params, centers_base, neighbors_base):
    """Straightforward JAX port of DGCN.forward (only used to validate the kernel)."""
    batch, channel, num_nodes = x.shape
    n_rows = batch * num_nodes
    num_edges = centers_base.shape[0]
    k = num_edges // num_nodes

    xf = jnp.transpose(x, (0, 2, 1)).reshape(n_rows, channel)
    offs = jnp.repeat(jnp.arange(batch, dtype=jnp.int32) * num_nodes, num_edges)
    centers = jnp.tile(centers_base, batch) + offs
    neighbors = jnp.tile(neighbors_base, batch) + offs

    def mlp(name, h):
        p = params[name]
        y = jnp.dot(h, p["w"].T, precision=jax.lax.Precision.HIGHEST)
        mean = jnp.mean(y, axis=0, keepdims=True)
        var = jnp.mean(jnp.square(y - mean), axis=0, keepdims=True)
        z = (y - mean) * jax.lax.rsqrt(var + _BN_EPS) * p["gamma"] + p["beta"]
        return jnp.where(z >= 0.0, z, _LRELU_SLOPE * z)

    def scatter_max(edge_vals):      # valid for a K-regular, center-sorted edge list
        return edge_vals.reshape(n_rows, k, -1).max(axis=1)

    e0 = jnp.take(xf, neighbors, axis=0) - jnp.take(xf, centers, axis=0)
    x0 = mlp("mlp0a", xf) + scatter_max(mlp("mlp0b", e0))

    def layer(name_a, name_b, xin):
        hb = jnp.take(mlp(name_b, xin), neighbors, axis=0)
        return mlp(name_a, xin) + scatter_max(hb)

    x1 = layer("mlp1a", "mlp1b", x0)
    x2 = layer("mlp2a", "mlp2b", x1)
    x3 = layer("mlp3a", "mlp3b", x2)

    x_cat = jnp.concatenate([x0, x1, x2, x3], axis=-1)
    return mlp("mlp4_cat", x_cat) + params["bias"]


# --------------------------------------------------------------------------- main

if __name__ == "__main__":
    key = jax.random.PRNGKey(0)
    k_params, k_x = jax.random.split(key)

    batch = 2
    num_nodes = 64                                # B*N = 128 -> one full lane-tile
    ring_offsets = (1, 2, 3, 4, -1, -2, -3, -4)   # K = 8 neighbors per node
    nf = [4, 16, 16, 32, 32]

    params = init_params(k_params, nf)
    x = jax.random.normal(k_x, (batch, nf[0], num_nodes), jnp.float32)

    y = dgcn_forward(x, params, ring_offsets=ring_offsets)
    y = jax.block_until_ready(y)

    assert y.shape == (batch * num_nodes, 1), y.shape
    assert y.dtype == jnp.float32
    assert bool(jnp.all(jnp.isfinite(y)))

    # Validate the fused kernel against the straightforward JAX port of the module.
    centers_base, neighbors_base = make_edge_index(num_nodes, ring_offsets)
    y_ref = dgcn_reference(x, params, centers_base, neighbors_base)
    max_err = float(jnp.max(jnp.abs(y - y_ref)))
    assert max_err < 5e-3, f"kernel/reference mismatch: max abs err {max_err}"

    print("KERNEL_OK")
</pallas_src>

<mosaic_0001>
module attributes {stable_mosaic.version = 11 : i64} {
  func.func @kernel(%arg0: memref<4x128xf32, #tpu.memory_space<vmem>>, %arg1: memref<32x4xf32, #tpu.memory_space<vmem>>, %arg2: memref<32x16xf32, #tpu.memory_space<vmem>>, %arg3: memref<64x16xf32, #tpu.memory_space<vmem>>, %arg4: memref<64x32xf32, #tpu.memory_space<vmem>>, %arg5: memref<8x96xf32, #tpu.memory_space<vmem>>, %arg6: memref<208x2xf32, #tpu.memory_space<vmem>>, %arg7: memref<8x128xf32, #tpu.memory_space<vmem>>) attributes {dimension_semantics = [], scalar_prefetch = 0 : i64, scratch_operands = 0 : i64, tpu.core_type = #tpu.core_type<tc>} {
    %c0 = arith.constant 0 : index
    %c0_0 = arith.constant 0 : index
    %0 = vector.load %arg0[%c0, %c0_0] : memref<4x128xf32, #tpu.memory_space<vmem>>, vector<4x128xf32>
    %c0_1 = arith.constant 0 : index
    %c0_2 = arith.constant 0 : index
    %1 = vector.load %arg1[%c0_1, %c0_2] : memref<32x4xf32, #tpu.memory_space<vmem>>, vector<32x4xf32>
    %cst = arith.constant dense<0.000000e+00> : vector<32x128xf32>
    %2 = tpu.matmul %1, %0, %cst {dimension_numbers = #tpu.dot_dimension_numbers<[1], [0], [0], [1], [0, 0, 1, 1], [], []>} : vector<32x4xf32>, vector<4x128xf32>, vector<32x128xf32> -> vector<32x128xf32>
    %c0_3 = arith.constant 0 : index
    %c0_4 = arith.constant 0 : index
    %3 = vector.load %arg6[%c0_3, %c0_4] : memref<208x2xf32, #tpu.memory_space<vmem>>, vector<16x1xf32>
    %c0_5 = arith.constant 0 : index
    %c1 = arith.constant 1 : index
    %4 = vector.load %arg6[%c0_5, %c1] : memref<208x2xf32, #tpu.memory_space<vmem>>, vector<16x1xf32>
    %c16 = arith.constant 16 : index
    %c0_6 = arith.constant 0 : index
    %5 = vector.load %arg6[%c16, %c0_6] : memref<208x2xf32, #tpu.memory_space<vmem>>, vector<16x1xf32>
    %c16_7 = arith.constant 16 : index
    %c1_8 = arith.constant 1 : index
    %6 = vector.load %arg6[%c16_7, %c1_8] : memref<208x2xf32, #tpu.memory_space<vmem>>, vector<16x1xf32>
    %7 = vector.extract_strided_slice %2 {offsets = [0, 0], sizes = [16, 128], strides = [1, 1]} : vector<32x128xf32> to vector<16x128xf32>
    %cst_9 = arith.constant dense<0.000000e+00> : vector<16xf32>
    %8 = vector.multi_reduction <add>, %7, %cst_9 [1] : vector<16x128xf32> to vector<16xf32>
    %9 = vector.shape_cast %8 : vector<16xf32> to vector<16x1xf32>
    %cst_10 = arith.constant 1.280000e+02 : f32
    %10 = vector.broadcast %cst_10 : f32 to vector<16x1xf32>
    %11 = arith.divf %9, %10 : vector<16x1xf32>
    %12 = vector.broadcast %11 : vector<16x1xf32> to vector<16x128xf32>
    %13 = arith.subf %7, %12 : vector<16x128xf32>
    %14 = arith.mulf %13, %13 : vector<16x128xf32>
    %cst_11 = arith.constant dense<0.000000e+00> : vector<16xf32>
    %15 = vector.multi_reduction <add>, %14, %cst_11 [1] : vector<16x128xf32> to vector<16xf32>
    %16 = vector.shape_cast %15 : vector<16xf32> to vector<16x1xf32>
    %cst_12 = arith.constant 1.280000e+02 : f32
    %17 = vector.broadcast %cst_12 : f32 to vector<16x1xf32>
    %18 = arith.divf %16, %17 : vector<16x1xf32>
    %cst_13 = arith.constant 9.99999974E-6 : f32
    %19 = vector.broadcast %cst_13 : f32 to vector<16x1xf32>
    %20 = arith.addf %18, %19 : vector<16x1xf32>
    %21 = math.rsqrt %20 : vector<16x1xf32>
    %22 = arith.mulf %3, %21 : vector<16x1xf32>
    %23 = vector.broadcast %22 : vector<16x1xf32> to vector<16x128xf32>
    %24 = arith.mulf %13, %23 : vector<16x128xf32>
    %25 = vector.broadcast %4 : vector<16x1xf32> to vector<16x128xf32>
    %26 = arith.addf %24, %25 : vector<16x128xf32>
    %cst_14 = arith.constant 2.000000e-01 : f32
    %27 = vector.broadcast %cst_14 : f32 to vector<16x128xf32>
    %28 = arith.mulf %27, %26 : vector<16x128xf32>
    %29 = arith.maximumf %26, %28 : vector<16x128xf32>
    %30 = vector.extract_strided_slice %2 {offsets = [16, 0], sizes = [16, 128], strides = [1, 1]} : vector<32x128xf32> to vector<16x128xf32>
    %c2_i32 = arith.constant 2 : i32
    %31 = tpu.dynamic_rotate %30 by %c2_i32 dim 1 : vector<16x128xf32>, i32 -> vector<16x128xf32>
    %32 = arith.subf %31, %30 : vector<16x128xf32>
    %c4_i32 = arith.constant 4 : i32
    %33 = tpu.dynamic_rotate %30 by %c4_i32 dim 1 : vector<16x128xf32>, i32 -> vector<16x128xf32>
    %34 = arith.subf %33, %30 : vector<16x128xf32>
    %c6_i32 = arith.constant 6 : i32
    %35 = tpu.dynamic_rotate %30 by %c6_i32 dim 1 : vector<16x128xf32>, i32 -> vector<16x128xf32>
    %36 = arith.subf %35, %30 : vector<16x128xf32>
    %c8_i32 = arith.constant 8 : i32
    %37 = tpu.dynamic_rotate %30 by %c8_i32 dim 1 : vector<16x128xf32>, i32 -> vector<16x128xf32>
    %38 = arith.subf %37, %30 : vector<16x128xf32>
    %c126_i32 = arith.constant 126 : i32
    %39 = tpu.dynamic_rotate %30 by %c126_i32 dim 1 : vector<16x128xf32>, i32 -> vector<16x128xf32>
    %40 = arith.subf %39, %30 : vector<16x128xf32>
    %c124_i32 = arith.constant 124 : i32
    %41 = tpu.dynamic_rotate %30 by %c124_i32 dim 1 : vector<16x128xf32>, i32 -> vector<16x128xf32>
    %42 = arith.subf %41, %30 : vector<16x128xf32>
    %c122_i32 = arith.constant 122 : i32
    %43 = tpu.dynamic_rotate %30 by %c122_i32 dim 1 : vector<16x128xf32>, i32 -> vector<16x128xf32>
    %44 = arith.subf %43, %30 : vector<16x128xf32>
    %c120_i32 = arith.constant 120 : i32
    %45 = tpu.dynamic_rotate %30 by %c120_i32 dim 1 : vector<16x128xf32>, i32 -> vector<16x128xf32>
    %46 = arith.subf %45, %30 : vector<16x128xf32>
    %cst_15 = arith.constant 0.000000e+00 : f32
    %47 = vector.broadcast %cst_15 : f32 to vector<16x1xf32>
    %cst_16 = arith.constant dense<0.000000e+00> : vector<16xf32>
    %48 = vector.multi_reduction <add>, %32, %cst_16 [1] : vector<16x128xf32> to vector<16xf32>
    %49 = vector.shape_cast %48 : vector<16xf32> to vector<16x1xf32>
    %50 = arith.addf %47, %49 : vector<16x1xf32>
    %cst_17 = arith.constant dense<0.000000e+00> : vector<16xf32>
    %51 = vector.multi_reduction <add>, %34, %cst_17 [1] : vector<16x128xf32> to vector<16xf32>
    %52 = vector.shape_cast %51 : vector<16xf32> to vector<16x1xf32>
    %53 = arith.addf %50, %52 : vector<16x1xf32>
    %cst_18 = arith.constant dense<0.000000e+00> : vector<16xf32>
    %54 = vector.multi_reduction <add>, %36, %cst_18 [1] : vector<16x128xf32> to vector<16xf32>
    %55 = vector.shape_cast %54 : vector<16xf32> to vector<16x1xf32>
    %56 = arith.addf %53, %55 : vector<16x1xf32>
    %cst_19 = arith.constant dense<0.000000e+00> : vector<16xf32>
    %57 = vector.multi_reduction <add>, %38, %cst_19 [1] : vector<16x128xf32> to vector<16xf32>
    %58 = vector.shape_cast %57 : vector<16xf32> to vector<16x1xf32>
    %59 = arith.addf %56, %58 : vector<16x1xf32>
    %cst_20 = arith.constant dense<0.000000e+00> : vector<16xf32>
    %60 = vector.multi_reduction <add>, %40, %cst_20 [1] : vector<16x128xf32> to vector<16xf32>
    %61 = vector.shape_cast %60 : vector<16xf32> to vector<16x1xf32>
    %62 = arith.addf %59, %61 : vector<16x1xf32>
    %cst_21 = arith.constant dense<0.000000e+00> : vector<16xf32>
    %63 = vector.multi_reduction <add>, %42, %cst_21 [1] : vector<16x128xf32> to vector<16xf32>
    %64 = vector.shape_cast %63 : vector<16xf32> to vector<16x1xf32>
    %65 = arith.addf %62, %64 : vector<16x1xf32>
    %cst_22 = arith.constant dense<0.000000e+00> : vector<16xf32>
    %66 = vector.multi_reduction <add>, %44, %cst_22 [1] : vector<16x128xf32> to vector<16xf32>
    %67 = vector.shape_cast %66 : vector<16xf32> to vector<16x1xf32>
    %68 = arith.addf %65, %67 : vector<16x1xf32>
    %cst_23 = arith.constant dense<0.000000e+00> : vector<16xf32>
    %69 = vector.multi_reduction <add>, %46, %cst_23 [1] : vector<16x128xf32> to vector<16xf32>
    %70 = vector.shape_cast %69 : vector<16xf32> to vector<16x1xf32>
    %71 = arith.addf %68, %70 : vector<16x1xf32>
    %cst_24 = arith.constant 9.765625E-4 : f32
    %72 = vector.broadcast %cst_24 : f32 to vector<16x1xf32>
    %73 = arith.mulf %71, %72 : vector<16x1xf32>
    %cst_25 = arith.constant 0.000000e+00 : f32
    %74 = vector.broadcast %cst_25 : f32 to vector<16x1xf32>
    %75 = vector.broadcast %73 : vector<16x1xf32> to vector<16x128xf32>
    %76 = arith.subf %32, %75 : vector<16x128xf32>
    %77 = arith.mulf %76, %76 : vector<16x128xf32>
    %cst_26 = arith.constant dense<0.000000e+00> : vector<16xf32>
    %78 = vector.multi_reduction <add>, %77, %cst_26 [1] : vector<16x128xf32> to vector<16xf32>
    %79 = vector.shape_cast %78 : vector<16xf32> to vector<16x1xf32>
    %80 = arith.addf %74, %79 : vector<16x1xf32>
    %81 = vector.broadcast %73 : vector<16x1xf32> to vector<16x128xf32>
    %82 = arith.subf %34, %81 : vector<16x128xf32>
    %83 = arith.mulf %82, %82 : vector<16x128xf32>
    %cst_27 = arith.constant dense<0.000000e+00> : vector<16xf32>
    %84 = vector.multi_reduction <add>, %83, %cst_27 [1] : vector<16x128xf32> to vector<16xf32>
    %85 = vector.shape_cast %84 : vector<16xf32> to vector<16x1xf32>
    %86 = arith.addf %80, %85 : vector<16x1xf32>
    %87 = vector.broadcast %73 : vector<16x1xf32> to vector<16x128xf32>
    %88 = arith.subf %36, %87 : vector<16x128xf32>
    %89 = arith.mulf %88, %88 : vector<16x128xf32>
    %cst_28 = arith.constant dense<0.000000e+00> : vector<16xf32>
    %90 = vector.multi_reduction <add>, %89, %cst_28 [1] : vector<16x128xf32> to vector<16xf32>
    %91 = vector.shape_cast %90 : vector<16xf32> to vector<16x1xf32>
    %92 = arith.addf %86, %91 : vector<16x1xf32>
    %93 = vector.broadcast %73 : vector<16x1xf32> to vector<16x128xf32>
    %94 = arith.subf %38, %93 : vector<16x128xf32>
    %95 = arith.mulf %94, %94 : vector<16x128xf32>
    %cst_29 = arith.constant dense<0.000000e+00> : vector<16xf32>
    %96 = vector.multi_reduction <add>, %95, %cst_29 [1] : vector<16x128xf32> to vector<16xf32>
    %97 = vector.shape_cast %96 : vector<16xf32> to vector<16x1xf32>
    %98 = arith.addf %92, %97 : vector<16x1xf32>
    %99 = vector.broadcast %73 : vector<16x1xf32> to vector<16x128xf32>
    %100 = arith.subf %40, %99 : vector<16x128xf32>
    %101 = arith.mulf %100, %100 : vector<16x128xf32>
    %cst_30 = arith.constant dense<0.000000e+00> : vector<16xf32>
    %102 = vector.multi_reduction <add>, %101, %cst_30 [1] : vector<16x128xf32> to vector<16xf32>
    %103 = vector.shape_cast %102 : vector<16xf32> to vector<16x1xf32>
    %104 = arith.addf %98, %103 : vector<16x1xf32>
    %105 = vector.broadcast %73 : vector<16x1xf32> to vector<16x128xf32>
    %106 = arith.subf %42, %105 : vector<16x128xf32>
    %107 = arith.mulf %106, %106 : vector<16x128xf32>
    %cst_31 = arith.constant dense<0.000000e+00> : vector<16xf32>
    %108 = vector.multi_reduction <add>, %107, %cst_31 [1] : vector<16x128xf32> to vector<16xf32>
    %109 = vector.shape_cast %108 : vector<16xf32> to vector<16x1xf32>
    %110 = arith.addf %104, %109 : vector<16x1xf32>
    %111 = vector.broadcast %73 : vector<16x1xf32> to vector<16x128xf32>
    %112 = arith.subf %44, %111 : vector<16x128xf32>
    %113 = arith.mulf %112, %112 : vector<16x128xf32>
    %cst_32 = arith.constant dense<0.000000e+00> : vector<16xf32>
    %114 = vector.multi_reduction <add>, %113, %cst_32 [1] : vector<16x128xf32> to vector<16xf32>
    %115 = vector.shape_cast %114 : vector<16xf32> to vector<16x1xf32>
    %116 = arith.addf %110, %115 : vector<16x1xf32>
    %117 = vector.broadcast %73 : vector<16x1xf32> to vector<16x128xf32>
    %118 = arith.subf %46, %117 : vector<16x128xf32>
    %119 = arith.mulf %118, %118 : vector<16x128xf32>
    %cst_33 = arith.constant dense<0.000000e+00> : vector<16xf32>
    %120 = vector.multi_reduction <add>, %119, %cst_33 [1] : vector<16x128xf32> to vector<16xf32>
    %121 = vector.shape_cast %120 : vector<16xf32> to vector<16x1xf32>
    %122 = arith.addf %116, %121 : vector<16x1xf32>
    %cst_34 = arith.constant 9.765625E-4 : f32
    %123 = vector.broadcast %cst_34 : f32 to vector<16x1xf32>
    %124 = arith.mulf %122, %123 : vector<16x1xf32>
    %cst_35 = arith.constant 9.99999974E-6 : f32
    %125 = vector.broadcast %cst_35 : f32 to vector<16x1xf32>
    %126 = arith.addf %124, %125 : vector<16x1xf32>
    %127 = math.rsqrt %126 : vector<16x1xf32>
    %128 = arith.mulf %5, %127 : vector<16x1xf32>
    %129 = arith.mulf %73, %128 : vector<16x1xf32>
    %130 = arith.subf %6, %129 : vector<16x1xf32>
    %131 = vector.broadcast %128 : vector<16x1xf32> to vector<16x128xf32>
    %132 = arith.mulf %32, %131 : vector<16x128xf32>
    %133 = vector.broadcast %130 : vector<16x1xf32> to vector<16x128xf32>
    %134 = arith.addf %132, %133 : vector<16x128xf32>
    %cst_36 = arith.constant 2.000000e-01 : f32
    %135 = vector.broadcast %cst_36 : f32 to vector<16x128xf32>
    %136 = arith.mulf %135, %134 : vector<16x128xf32>
    %137 = arith.maximumf %134, %136 : vector<16x128xf32>
    %138 = vector.broadcast %128 : vector<16x1xf32> to vector<16x128xf32>
    %139 = arith.mulf %34, %138 : vector<16x128xf32>
    %140 = vector.broadcast %130 : vector<16x1xf32> to vector<16x128xf32>
    %141 = arith.addf %139, %140 : vector<16x128xf32>
    %cst_37 = arith.constant 2.000000e-01 : f32
    %142 = vector.broadcast %cst_37 : f32 to vector<16x128xf32>
    %143 = arith.mulf %142, %141 : vector<16x128xf32>
    %144 = arith.maximumf %141, %143 : vector<16x128xf32>
    %145 = arith.maximumf %137, %144 : vector<16x128xf32>
    %146 = vector.broadcast %128 : vector<16x1xf32> to vector<16x128xf32>
    %147 = arith.mulf %36, %146 : vector<16x128xf32>
    %148 = vector.broadcast %130 : vector<16x1xf32> to vector<16x128xf32>
    %149 = arith.addf %147, %148 : vector<16x128xf32>
    %cst_38 = arith.constant 2.000000e-01 : f32
    %150 = vector.broadcast %cst_38 : f32 to vector<16x128xf32>
    %151 = arith.mulf %150, %149 : vector<16x128xf32>
    %152 = arith.maximumf %149, %151 : vector<16x128xf32>
    %153 = arith.maximumf %145, %152 : vector<16x128xf32>
    %154 = vector.broadcast %128 : vector<16x1xf32> to vector<16x128xf32>
    %155 = arith.mulf %38, %154 : vector<16x128xf32>
    %156 = vector.broadcast %130 : vector<16x1xf32> to vector<16x128xf32>
    %157 = arith.addf %155, %156 : vector<16x128xf32>
    %cst_39 = arith.constant 2.000000e-01 : f32
    %158 = vector.broadcast %cst_39 : f32 to vector<16x128xf32>
    %159 = arith.mulf %158, %157 : vector<16x128xf32>
    %160 = arith.maximumf %157, %159 : vector<16x128xf32>
    %161 = arith.maximumf %153, %160 : vector<16x128xf32>
    %162 = vector.broadcast %128 : vector<16x1xf32> to vector<16x128xf32>
    %163 = arith.mulf %40, %162 : vector<16x128xf32>
    %164 = vector.broadcast %130 : vector<16x1xf32> to vector<16x128xf32>
    %165 = arith.addf %163, %164 : vector<16x128xf32>
    %cst_40 = arith.constant 2.000000e-01 : f32
    %166 = vector.broadcast %cst_40 : f32 to vector<16x128xf32>
    %167 = arith.mulf %166, %165 : vector<16x128xf32>
    %168 = arith.maximumf %165, %167 : vector<16x128xf32>
    %169 = arith.maximumf %161, %168 : vector<16x128xf32>
    %170 = vector.broadcast %128 : vector<16x1xf32> to vector<16x128xf32>
    %171 = arith.mulf %42, %170 : vector<16x128xf32>
    %172 = vector.broadcast %130 : vector<16x1xf32> to vector<16x128xf32>
    %173 = arith.addf %171, %172 : vector<16x128xf32>
    %cst_41 = arith.constant 2.000000e-01 : f32
    %174 = vector.broadcast %cst_41 : f32 to vector<16x128xf32>
    %175 = arith.mulf %174, %173 : vector<16x128xf32>
    %176 = arith.maximumf %173, %175 : vector<16x128xf32>
    %177 = arith.maximumf %169, %176 : vector<16x128xf32>
    %178 = vector.broadcast %128 : vector<16x1xf32> to vector<16x128xf32>
    %179 = arith.mulf %44, %178 : vector<16x128xf32>
    %180 = vector.broadcast %130 : vector<16x1xf32> to vector<16x128xf32>
    %181 = arith.addf %179, %180 : vector<16x128xf32>
    %cst_42 = arith.constant 2.000000e-01 : f32
    %182 = vector.broadcast %cst_42 : f32 to vector<16x128xf32>
    %183 = arith.mulf %182, %181 : vector<16x128xf32>
    %184 = arith.maximumf %181, %183 : vector<16x128xf32>
    %185 = arith.maximumf %177, %184 : vector<16x128xf32>
    %186 = vector.broadcast %128 : vector<16x1xf32> to vector<16x128xf32>
    %187 = arith.mulf %46, %186 : vector<16x128xf32>
    %188 = vector.broadcast %130 : vector<16x1xf32> to vector<16x128xf32>
    %189 = arith.addf %187, %188 : vector<16x128xf32>
    %cst_43 = arith.constant 2.000000e-01 : f32
    %190 = vector.broadcast %cst_43 : f32 to vector<16x128xf32>
    %191 = arith.mulf %190, %189 : vector<16x128xf32>
    %192 = arith.maximumf %189, %191 : vector<16x128xf32>
    %193 = arith.maximumf %185, %192 : vector<16x128xf32>
    %194 = arith.addf %29, %193 : vector<16x128xf32>
    %c0_44 = arith.constant 0 : index
    %c0_45 = arith.constant 0 : index
    %195 = vector.load %arg2[%c0_44, %c0_45] : memref<32x16xf32, #tpu.memory_space<vmem>>, vector<32x16xf32>
    %cst_46 = arith.constant dense<0.000000e+00> : vector<32x128xf32>
    %196 = tpu.matmul %195, %194, %cst_46 {dimension_numbers = #tpu.dot_dimension_numbers<[1], [0], [0], [1], [0, 0, 1, 1], [], []>} : vector<32x16xf32>, vector<16x128xf32>, vector<32x128xf32> -> vector<32x128xf32>
    %c32 = arith.constant 32 : index
    %c0_47 = arith.constant 0 : index
    %197 = vector.load %arg6[%c32, %c0_47] : memref<208x2xf32, #tpu.memory_space<vmem>>, vector<32x1xf32>
    %c32_48 = arith.constant 32 : index
    %c1_49 = arith.constant 1 : index
    %198 = vector.load %arg6[%c32_48, %c1_49] : memref<208x2xf32, #tpu.memory_space<vmem>>, vector<32x1xf32>
    %cst_50 = arith.constant dense<0.000000e+00> : vector<32xf32>
    %199 = vector.multi_reduction <add>, %196, %cst_50 [1] : vector<32x128xf32> to vector<32xf32>
    %200 = vector.shape_cast %199 : vector<32xf32> to vector<32x1xf32>
    %cst_51 = arith.constant 1.280000e+02 : f32
    %201 = vector.broadcast %cst_51 : f32 to vector<32x1xf32>
    %202 = arith.divf %200, %201 : vector<32x1xf32>
    %203 = vector.broadcast %202 : vector<32x1xf32> to vector<32x128xf32>
    %204 = arith.subf %196, %203 : vector<32x128xf32>
    %205 = arith.mulf %204, %204 : vector<32x128xf32>
    %cst_52 = arith.constant dense<0.000000e+00> : vector<32xf32>
    %206 = vector.multi_reduction <add>, %205, %cst_52 [1] : vector<32x128xf32> to vector<32xf32>
    %207 = vector.shape_cast %206 : vector<32xf32> to vector<32x1xf32>
    %cst_53 = arith.constant 1.280000e+02 : f32
    %208 = vector.broadcast %cst_53 : f32 to vector<32x1xf32>
    %209 = arith.divf %207, %208 : vector<32x1xf32>
    %cst_54 = arith.constant 9.99999974E-6 : f32
    %210 = vector.broadcast %cst_54 : f32 to vector<32x1xf32>
    %211 = arith.addf %209, %210 : vector<32x1xf32>
    %212 = math.rsqrt %211 : vector<32x1xf32>
    %213 = arith.mulf %197, %212 : vector<32x1xf32>
    %214 = vector.broadcast %213 : vector<32x1xf32> to vector<32x128xf32>
    %215 = arith.mulf %204, %214 : vector<32x128xf32>
    %216 = vector.broadcast %198 : vector<32x1xf32> to vector<32x128xf32>
    %217 = arith.addf %215, %216 : vector<32x128xf32>
    %cst_55 = arith.constant 2.000000e-01 : f32
    %218 = vector.broadcast %cst_55 : f32 to vector<32x128xf32>
    %219 = arith.mulf %218, %217 : vector<32x128xf32>
    %220 = arith.maximumf %217, %219 : vector<32x128xf32>
    %221 = vector.extract_strided_slice %220 {offsets = [0, 0], sizes = [16, 128], strides = [1, 1]} : vector<32x128xf32> to vector<16x128xf32>
    %222 = vector.extract_strided_slice %220 {offsets = [16, 0], sizes = [16, 128], strides = [1, 1]} : vector<32x128xf32> to vector<16x128xf32>
    %c2_i32_56 = arith.constant 2 : i32
    %223 = tpu.dynamic_rotate %222 by %c2_i32_56 dim 1 : vector<16x128xf32>, i32 -> vector<16x128xf32>
    %c4_i32_57 = arith.constant 4 : i32
    %224 = tpu.dynamic_rotate %222 by %c4_i32_57 dim 1 : vector<16x128xf32>, i32 -> vector<16x128xf32>
    %225 = arith.maximumf %223, %224 : vector<16x128xf32>
    %c6_i32_58 = arith.constant 6 : i32
    %226 = tpu.dynamic_rotate %222 by %c6_i32_58 dim 1 : vector<16x128xf32>, i32 -> vector<16x128xf32>
    %227 = arith.maximumf %225, %226 : vector<16x128xf32>
    %c8_i32_59 = arith.constant 8 : i32
    %228 = tpu.dynamic_rotate %222 by %c8_i32_59 dim 1 : vector<16x128xf32>, i32 -> vector<16x128xf32>
    %229 = arith.maximumf %227, %228 : vector<16x128xf32>
    %c126_i32_60 = arith.constant 126 : i32
    %230 = tpu.dynamic_rotate %222 by %c126_i32_60 dim 1 : vector<16x128xf32>, i32 -> vector<16x128xf32>
    %231 = arith.maximumf %229, %230 : vector<16x128xf32>
    %c124_i32_61 = arith.constant 124 : i32
    %232 = tpu.dynamic_rotate %222 by %c124_i32_61 dim 1 : vector<16x128xf32>, i32 -> vector<16x128xf32>
    %233 = arith.maximumf %231, %232 : vector<16x128xf32>
    %c122_i32_62 = arith.constant 122 : i32
    %234 = tpu.dynamic_rotate %222 by %c122_i32_62 dim 1 : vector<16x128xf32>, i32 -> vector<16x128xf32>
    %235 = arith.maximumf %233, %234 : vector<16x128xf32>
    %c120_i32_63 = arith.constant 120 : i32
    %236 = tpu.dynamic_rotate %222 by %c120_i32_63 dim 1 : vector<16x128xf32>, i32 -> vector<16x128xf32>
    %237 = arith.maximumf %235, %236 : vector<16x128xf32>
    %238 = arith.addf %221, %237 : vector<16x128xf32>
    %c0_64 = arith.constant 0 : index
    %c0_65 = arith.constant 0 : index
    %239 = vector.load %arg3[%c0_64, %c0_65] : memref<64x16xf32, #tpu.memory_space<vmem>>, vector<64x16xf32>
    %cst_66 = arith.constant dense<0.000000e+00> : vector<64x128xf32>
    %240 = tpu.matmul %239, %238, %cst_66 {dimension_numbers = #tpu.dot_dimension_numbers<[1], [0], [0], [1], [0, 0, 1, 1], [], []>} : vector<64x16xf32>, vector<16x128xf32>, vector<64x128xf32> -> vector<64x128xf32>
    %c64 = arith.constant 64 : index
    %c0_67 = arith.constant 0 : index
    %241 = vector.load %arg6[%c64, %c0_67] : memref<208x2xf32, #tpu.memory_space<vmem>>, vector<64x1xf32>
    %c64_68 = arith.constant 64 : index
    %c1_69 = arith.constant 1 : index
    %242 = vector.load %arg6[%c64_68, %c1_69] : memref<208x2xf32, #tpu.memory_space<vmem>>, vector<64x1xf32>
    %cst_70 = arith.constant dense<0.000000e+00> : vector<64xf32>
    %243 = vector.multi_reduction <add>, %240, %cst_70 [1] : vector<64x128xf32> to vector<64xf32>
    %244 = vector.shape_cast %243 : vector<64xf32> to vector<64x1xf32>
    %cst_71 = arith.constant 1.280000e+02 : f32
    %245 = vector.broadcast %cst_71 : f32 to vector<64x1xf32>
    %246 = arith.divf %244, %245 : vector<64x1xf32>
    %247 = vector.broadcast %246 : vector<64x1xf32> to vector<64x128xf32>
    %248 = arith.subf %240, %247 : vector<64x128xf32>
    %249 = arith.mulf %248, %248 : vector<64x128xf32>
    %cst_72 = arith.constant dense<0.000000e+00> : vector<64xf32>
    %250 = vector.multi_reduction <add>, %249, %cst_72 [1] : vector<64x128xf32> to vector<64xf32>
    %251 = vector.shape_cast %250 : vector<64xf32> to vector<64x1xf32>
    %cst_73 = arith.constant 1.280000e+02 : f32
    %252 = vector.broadcast %cst_73 : f32 to vector<64x1xf32>
    %253 = arith.divf %251, %252 : vector<64x1xf32>
    %cst_74 = arith.constant 9.99999974E-6 : f32
    %254 = vector.broadcast %cst_74 : f32 to vector<64x1xf32>
    %255 = arith.addf %253, %254 : vector<64x1xf32>
    %256 = math.rsqrt %255 : vector<64x1xf32>
    %257 = arith.mulf %241, %256 : vector<64x1xf32>
    %258 = vector.broadcast %257 : vector<64x1xf32> to vector<64x128xf32>
    %259 = arith.mulf %248, %258 : vector<64x128xf32>
    %260 = vector.broadcast %242 : vector<64x1xf32> to vector<64x128xf32>
    %261 = arith.addf %259, %260 : vector<64x128xf32>
    %cst_75 = arith.constant 2.000000e-01 : f32
    %262 = vector.broadcast %cst_75 : f32 to vector<64x128xf32>
    %263 = arith.mulf %262, %261 : vector<64x128xf32>
    %264 = arith.maximumf %261, %263 : vector<64x128xf32>
    %265 = vector.extract_strided_slice %264 {offsets = [0, 0], sizes = [32, 128], strides = [1, 1]} : vector<64x128xf32> to vector<32x128xf32>
    %266 = vector.extract_strided_slice %264 {offsets = [32, 0], sizes = [32, 128], strides = [1, 1]} : vector<64x128xf32> to vector<32x128xf32>
    %c2_i32_76 = arith.constant 2 : i32
    %267 = tpu.dynamic_rotate %266 by %c2_i32_76 dim 1 : vector<32x128xf32>, i32 -> vector<32x128xf32>
    %c4_i32_77 = arith.constant 4 : i32
    %268 = tpu.dynamic_rotate %266 by %c4_i32_77 dim 1 : vector<32x128xf32>, i32 -> vector<32x128xf32>
    %269 = arith.maximumf %267, %268 : vector<32x128xf32>
    %c6_i32_78 = arith.constant 6 : i32
    %270 = tpu.dynamic_rotate %266 by %c6_i32_78 dim 1 : vector<32x128xf32>, i32 -> vector<32x128xf32>
    %271 = arith.maximumf %269, %270 : vector<32x128xf32>
    %c8_i32_79 = arith.constant 8 : i32
    %272 = tpu.dynamic_rotate %266 by %c8_i32_79 dim 1 : vector<32x128xf32>, i32 -> vector<32x128xf32>
    %273 = arith.maximumf %271, %272 : vector<32x128xf32>
    %c126_i32_80 = arith.constant 126 : i32
    %274 = tpu.dynamic_rotate %266 by %c126_i32_80 dim 1 : vector<32x128xf32>, i32 -> vector<32x128xf32>
    %275 = arith.maximumf %273, %274 : vector<32x128xf32>
    %c124_i32_81 = arith.constant 124 : i32
    %276 = tpu.dynamic_rotate %266 by %c124_i32_81 dim 1 : vector<32x128xf32>, i32 -> vector<32x128xf32>
    %277 = arith.maximumf %275, %276 : vector<32x128xf32>
    %c122_i32_82 = arith.constant 122 : i32
    %278 = tpu.dynamic_rotate %266 by %c122_i32_82 dim 1 : vector<32x128xf32>, i32 -> vector<32x128xf32>
    %279 = arith.maximumf %277, %278 : vector<32x128xf32>
    %c120_i32_83 = arith.constant 120 : i32
    %280 = tpu.dynamic_rotate %266 by %c120_i32_83 dim 1 : vector<32x128xf32>, i32 -> vector<32x128xf32>
    %281 = arith.maximumf %279, %280 : vector<32x128xf32>
    %282 = arith.addf %265, %281 : vector<32x128xf32>
    %c0_84 = arith.constant 0 : index
    %c0_85 = arith.constant 0 : index
    %283 = vector.load %arg4[%c0_84, %c0_85] : memref<64x32xf32, #tpu.memory_space<vmem>>, vector<64x32xf32>
    %cst_86 = arith.constant dense<0.000000e+00> : vector<64x128xf32>
    %284 = tpu.matmul %283, %282, %cst_86 {dimension_numbers = #tpu.dot_dimension_numbers<[1], [0], [0], [1], [0, 0, 1, 1], [], []>} : vector<64x32xf32>, vector<32x128xf32>, vector<64x128xf32> -> vector<64x128xf32>
    %c128 = arith.constant 128 : index
    %c0_87 = arith.constant 0 : index
    %285 = vector.load %arg6[%c128, %c0_87] : memref<208x2xf32, #tpu.memory_space<vmem>>, vector<64x1xf32>
    %c128_88 = arith.constant 128 : index
    %c1_89 = arith.constant 1 : index
    %286 = vector.load %arg6[%c128_88, %c1_89] : memref<208x2xf32, #tpu.memory_space<vmem>>, vector<64x1xf32>
    %cst_90 = arith.constant dense<0.000000e+00> : vector<64xf32>
    %287 = vector.multi_reduction <add>, %284, %cst_90 [1] : vector<64x128xf32> to vector<64xf32>
    %288 = vector.shape_cast %287 : vector<64xf32> to vector<64x1xf32>
    %cst_91 = arith.constant 1.280000e+02 : f32
    %289 = vector.broadcast %cst_91 : f32 to vector<64x1xf32>
    %290 = arith.divf %288, %289 : vector<64x1xf32>
    %291 = vector.broadcast %290 : vector<64x1xf32> to vector<64x128xf32>
    %292 = arith.subf %284, %291 : vector<64x128xf32>
    %293 = arith.mulf %292, %292 : vector<64x128xf32>
    %cst_92 = arith.constant dense<0.000000e+00> : vector<64xf32>
    %294 = vector.multi_reduction <add>, %293, %cst_92 [1] : vector<64x128xf32> to vector<64xf32>
    %295 = vector.shape_cast %294 : vector<64xf32> to vector<64x1xf32>
    %cst_93 = arith.constant 1.280000e+02 : f32
    %296 = vector.broadcast %cst_93 : f32 to vector<64x1xf32>
    %297 = arith.divf %295, %296 : vector<64x1xf32>
    %cst_94 = arith.constant 9.99999974E-6 : f32
    %298 = vector.broadcast %cst_94 : f32 to vector<64x1xf32>
    %299 = arith.addf %297, %298 : vector<64x1xf32>
    %300 = math.rsqrt %299 : vector<64x1xf32>
    %301 = arith.mulf %285, %300 : vector<64x1xf32>
    %302 = vector.broadcast %301 : vector<64x1xf32> to vector<64x128xf32>
    %303 = arith.mulf %292, %302 : vector<64x128xf32>
    %304 = vector.broadcast %286 : vector<64x1xf32> to vector<64x128xf32>
    %305 = arith.addf %303, %304 : vector<64x128xf32>
    %cst_95 = arith.constant 2.000000e-01 : f32
    %306 = vector.broadcast %cst_95 : f32 to vector<64x128xf32>
    %307 = arith.mulf %306, %305 : vector<64x128xf32>
    %308 = arith.maximumf %305, %307 : vector<64x128xf32>
    %309 = vector.extract_strided_slice %308 {offsets = [0, 0], sizes = [32, 128], strides = [1, 1]} : vector<64x128xf32> to vector<32x128xf32>
    %310 = vector.extract_strided_slice %308 {offsets = [32, 0], sizes = [32, 128], strides = [1, 1]} : vector<64x128xf32> to vector<32x128xf32>
    %c2_i32_96 = arith.constant 2 : i32
    %311 = tpu.dynamic_rotate %310 by %c2_i32_96 dim 1 : vector<32x128xf32>, i32 -> vector<32x128xf32>
    %c4_i32_97 = arith.constant 4 : i32
    %312 = tpu.dynamic_rotate %310 by %c4_i32_97 dim 1 : vector<32x128xf32>, i32 -> vector<32x128xf32>
    %313 = arith.maximumf %311, %312 : vector<32x128xf32>
    %c6_i32_98 = arith.constant 6 : i32
    %314 = tpu.dynamic_rotate %310 by %c6_i32_98 dim 1 : vector<32x128xf32>, i32 -> vector<32x128xf32>
    %315 = arith.maximumf %313, %314 : vector<32x128xf32>
    %c8_i32_99 = arith.constant 8 : i32
    %316 = tpu.dynamic_rotate %310 by %c8_i32_99 dim 1 : vector<32x128xf32>, i32 -> vector<32x128xf32>
    %317 = arith.maximumf %315, %316 : vector<32x128xf32>
    %c126_i32_100 = arith.constant 126 : i32
    %318 = tpu.dynamic_rotate %310 by %c126_i32_100 dim 1 : vector<32x128xf32>, i32 -> vector<32x128xf32>
    %319 = arith.maximumf %317, %318 : vector<32x128xf32>
    %c124_i32_101 = arith.constant 124 : i32
    %320 = tpu.dynamic_rotate %310 by %c124_i32_101 dim 1 : vector<32x128xf32>, i32 -> vector<32x128xf32>
    %321 = arith.maximumf %319, %320 : vector<32x128xf32>
    %c122_i32_102 = arith.constant 122 : i32
    %322 = tpu.dynamic_rotate %310 by %c122_i32_102 dim 1 : vector<32x128xf32>, i32 -> vector<32x128xf32>
    %323 = arith.maximumf %321, %322 : vector<32x128xf32>
    %c120_i32_103 = arith.constant 120 : i32
    %324 = tpu.dynamic_rotate %310 by %c120_i32_103 dim 1 : vector<32x128xf32>, i32 -> vector<32x128xf32>
    %325 = arith.maximumf %323, %324 : vector<32x128xf32>
    %326 = arith.addf %309, %325 : vector<32x128xf32>
    %327 = tpu.concatenate %194, %238, %282, %326 in 0 : vector<16x128xf32>, vector<16x128xf32>, vector<32x128xf32>, vector<32x128xf32> -> vector<96x128xf32>
    %c0_104 = arith.constant 0 : index
    %c0_105 = arith.constant 0 : index
    %328 = vector.load %arg5[%c0_104, %c0_105] : memref<8x96xf32, #tpu.memory_space<vmem>>, vector<8x96xf32>
    %cst_106 = arith.constant dense<0.000000e+00> : vector<8x128xf32>
    %329 = tpu.matmul %328, %327, %cst_106 {dimension_numbers = #tpu.dot_dimension_numbers<[1], [0], [0], [1], [0, 0, 1, 1], [], []>} : vector<8x96xf32>, vector<96x128xf32>, vector<8x128xf32> -> vector<8x128xf32>
    %c192 = arith.constant 192 : index
    %c0_107 = arith.constant 0 : index
    %330 = vector.load %arg6[%c192, %c0_107] : memref<208x2xf32, #tpu.memory_space<vmem>>, vector<8x1xf32>
    %c192_108 = arith.constant 192 : index
    %c1_109 = arith.constant 1 : index
    %331 = vector.load %arg6[%c192_108, %c1_109] : memref<208x2xf32, #tpu.memory_space<vmem>>, vector<8x1xf32>
    %cst_110 = arith.constant dense<0.000000e+00> : vector<8xf32>
    %332 = vector.multi_reduction <add>, %329, %cst_110 [1] : vector<8x128xf32> to vector<8xf32>
    %333 = vector.shape_cast %332 : vector<8xf32> to vector<8x1xf32>
    %cst_111 = arith.constant 1.280000e+02 : f32
    %334 = vector.broadcast %cst_111 : f32 to vector<8x1xf32>
    %335 = arith.divf %333, %334 : vector<8x1xf32>
    %336 = vector.broadcast %335 : vector<8x1xf32> to vector<8x128xf32>
    %337 = arith.subf %329, %336 : vector<8x128xf32>
    %338 = arith.mulf %337, %337 : vector<8x128xf32>
    %cst_112 = arith.constant dense<0.000000e+00> : vector<8xf32>
    %339 = vector.multi_reduction <add>, %338, %cst_112 [1] : vector<8x128xf32> to vector<8xf32>
    %340 = vector.shape_cast %339 : vector<8xf32> to vector<8x1xf32>
    %cst_113 = arith.constant 1.280000e+02 : f32
    %341 = vector.broadcast %cst_113 : f32 to vector<8x1xf32>
    %342 = arith.divf %340, %341 : vector<8x1xf32>
    %cst_114 = arith.constant 9.99999974E-6 : f32
    %343 = vector.broadcast %cst_114 : f32 to vector<8x1xf32>
    %344 = arith.addf %342, %343 : vector<8x1xf32>
    %345 = math.rsqrt %344 : vector<8x1xf32>
    %346 = arith.mulf %330, %345 : vector<8x1xf32>
    %347 = vector.broadcast %346 : vector<8x1xf32> to vector<8x128xf32>
    %348 = arith.mulf %337, %347 : vector<8x128xf32>
    %349 = vector.broadcast %331 : vector<8x1xf32> to vector<8x128xf32>
    %350 = arith.addf %348, %349 : vector<8x128xf32>
    %cst_115 = arith.constant 2.000000e-01 : f32
    %351 = vector.broadcast %cst_115 : f32 to vector<8x128xf32>
    %352 = arith.mulf %351, %350 : vector<8x128xf32>
    %353 = arith.maximumf %350, %352 : vector<8x128xf32>
    %c200 = arith.constant 200 : index
    %c0_116 = arith.constant 0 : index
    %354 = vector.load %arg6[%c200, %c0_116] : memref<208x2xf32, #tpu.memory_space<vmem>>, vector<8x1xf32>
    %355 = vector.broadcast %354 : vector<8x1xf32> to vector<8x128xf32>
    %356 = arith.addf %353, %355 : vector<8x128xf32>
    %c0_117 = arith.constant 0 : index
    %c0_118 = arith.constant 0 : index
    %357 = vector.load %arg7[%c0_117, %c0_118] : memref<8x128xf32, #tpu.memory_space<vmem>>, vector<8x128xf32>
    tpu.vector_store %arg7[%c0_117, %c0_118], %356 {strides = array<i32>} : memref<8x128xf32, #tpu.memory_space<vmem>>, vector<8x128xf32>,
    return
  }
}

</mosaic_0001>

<llo_original>
// kernel: squeeze.1
$region0: #{squeeze.1}
  %s0 = inlined_call_operand.vmem [shape: f32[128], index: 0, kind: input, shape index: {}]
  %s1 = inlined_call_operand.vmem [shape: f32[64,2], index: 1, kind: output, shape index: {}]
  $region1: #{squeeze.1} parent=0
    #allocation0 [shape = 'u8[4096]{0}', space=vmem, size = 0x1000, scoped, tag = 'scoped mem for input reshape']
    %s3 = ssub.s32 2, 1
    %v4 = vld [vmem:[%s0] sm:%s3]
    %5 = vst [vmem:[#allocation0] sm:%s3] %v4
    %v6 = vld [vmem:[#allocation0] sm:$0x1]
    %vm7 = vcmask 15360
    %8 = vst.msk [vmem:[%s1] sm:$0x1] %vm7, %v6
    %v9 = vld [vmem:[#allocation0] sm:$0x1]
    %10 = vrot.lane.b32.xlu0 %v9, 126
    %v11 = vpop.permute.xlu0 %10
    %vm12 = vcmask 15360
    %s13 = scalar_lea.vmem %s1, 1
    %14 = vst.msk [vmem:[%s13] sm:$0x1] %vm12, %v11
    %v15 = vld [vmem:[#allocation0] sm:$0x1]
    %16 = vrot.lane.b32.xlu0 %v15, 124
    %v17 = vpop.permute.xlu0 %16
    %vm18 = vcmask 15360
    %s19 = scalar_lea.vmem %s1, 2
    %20 = vst.msk [vmem:[%s19] sm:$0x1] %vm18, %v17
    %v21 = vld [vmem:[#allocation0] sm:$0x1]
    %22 = vrot.lane.b32.xlu0 %v21, 122
    %v23 = vpop.permute.xlu0 %22
    %vm24 = vcmask 15360
    %s25 = scalar_lea.vmem %s1, 3
    %26 = vst.msk [vmem:[%s25] sm:$0x1] %vm24, %v23
    %v27 = vld [vmem:[#allocation0] sm:$0x1]
    %28 = vrot.lane.b32.xlu0 %v27, 120
    %v29 = vpop.permute.xlu0 %28
    %vm30 = vcmask 15360
    %s31 = scalar_lea.vmem %s1, 4
    %32 = vst.msk [vmem:[%s31] sm:$0x1] %vm30, %v29
    %v33 = vld [vmem:[#allocation0] sm:$0x1]
    %34 = vrot.lane.b32.xlu0 %v33, 118
    %v35 = vpop.permute.xlu0 %34
    %vm36 = vcmask 15360
    %s37 = scalar_lea.vmem %s1, 5
    %38 = vst.msk [vmem:[%s37] sm:$0x1] %vm36, %v35
    %v39 = vld [vmem:[#allocation0] sm:$0x1]
    %40 = vrot.lane.b32.xlu0 %v39, 116
    %v41 = vpop.permute.xlu0 %40
    %vm42 = vcmask 15360
    %s43 = scalar_lea.vmem %s1, 6
    %44 = vst.msk [vmem:[%s43] sm:$0x1] %vm42, %v41
    %v45 = vld [vmem:[#allocation0] sm:$0x1]
    %46 = vrot.lane.b32.xlu0 %v45, 114
    %v47 = vpop.permute.xlu0 %46
    %vm48 = vcmask 15360
    %s49 = scalar_lea.vmem %s1, 7
    %50 = vst.msk [vmem:[%s49] sm:$0x1] %vm48, %v47
    %v51 = vld [vmem:[#allocation0] sm:$0x1]
    %52 = vrot.lane.b32.xlu0 %v51, 112
    %v53 = vpop.permute.xlu0 %52
    %vm54 = vcmask 15360
    %s55 = scalar_lea.vmem %s1, 8
    %56 = vst.msk [vmem:[%s55] sm:$0x1] %vm54, %v53
    %v57 = vld [vmem:[#allocation0] sm:$0x1]
    %58 = vrot.lane.b32.xlu0 %v57, 110
    %v59 = vpop.permute.xlu0 %58
    %vm60 = vcmask 15360
    %s61 = scalar_lea.vmem %s1, 9
    %62 = vst.msk [vmem:[%s61] sm:$0x1] %vm60, %v59
    %v63 = vld [vmem:[#allocation0] sm:$0x1]
    %64 = vrot.lane.b32.xlu0 %v63, 108
    %v65 = vpop.permute.xlu0 %64
    %vm66 = vcmask 15360
    %s67 = scalar_lea.vmem %s1, 10
    %68 = vst.msk [vmem:[%s67] sm:$0x1] %vm66, %v65
    %v69 = vld [vmem:[#allocation0] sm:$0x1]
    %70 = vrot.lane.b32.xlu0 %v69, 106
    %v71 = vpop.permute.xlu0 %70
    %vm72 = vcmask 15360
    %s73 = scalar_lea.vmem %s1, 11
    %74 = vst.msk [vmem:[%s73] sm:$0x1] %vm72, %v71
    %v75 = vld [vmem:[#allocation0] sm:$0x1]
    %76 = vrot.lane.b32.xlu0 %v75, 104
    %v77 = vpop.permute.xlu0 %76
    %vm78 = vcmask 15360
    %s79 = scalar_lea.vmem %s1, 12
    %80 = vst.msk [vmem:[%s79] sm:$0x1] %vm78, %v77
    %v81 = vld [vmem:[#allocation0] sm:$0x1]
    %82 = vrot.lane.b32.xlu0 %v81, 102
    %v83 = vpop.permute.xlu0 %82
    %vm84 = vcmask 15360
    %s85 = scalar_lea.vmem %s1, 13
    %86 = vst.msk [vmem:[%s85] sm:$0x1] %vm84, %v83
    %v87 = vld [vmem:[#allocation0] sm:$0x1]
    %88 = vrot.lane.b32.xlu0 %v87, 100
    %v89 = vpop.permute.xlu0 %88
    %vm90 = vcmask 15360
    %s91 = scalar_lea.vmem %s1, 14
    %92 = vst.msk [vmem:[%s91] sm:$0x1] %vm90, %v89
    %v93 = vld [vmem:[#allocation0] sm:$0x1]
    %94 = vrot.lane.b32.xlu0 %v93, 98
    %v95 = vpop.permute.xlu0 %94
    %vm96 = vcmask 15360
    %s97 = scalar_lea.vmem %s1, 15
    %98 = vst.msk [vmem:[%s97] sm:$0x1] %vm96, %v95
    %v99 = vld [vmem:[#allocation0] sm:$0x1]
    %100 = vrot.lane.b32.xlu0 %v99, 96
    %v101 = vpop.permute.xlu0 %100
    %vm102 = vcmask 15360
    %s103 = scalar_lea.vmem %s1, 16
    %104 = vst.msk [vmem:[%s103] sm:$0x1] %vm102, %v101
    %v105 = vld [vmem:[#allocation0] sm:$0x1]
    %106 = vrot.lane.b32.xlu0 %v105, 94
    %v107 = vpop.permute.xlu0 %106
    %vm108 = vcmask 15360
    %s109 = scalar_lea.vmem %s1, 17
    %110 = vst.msk [vmem:[%s109] sm:$0x1] %vm108, %v107
    %v111 = vld [vmem:[#allocation0] sm:$0x1]
    %112 = vrot.lane.b32.xlu0 %v111, 92
    %v113 = vpop.permute.xlu0 %112
    %vm114 = vcmask 15360
    %s115 = scalar_lea.vmem %s1, 18
    %116 = vst.msk [vmem:[%s115] sm:$0x1] %vm114, %v113
    %v117 = vld [vmem:[#allocation0] sm:$0x1]
    %118 = vrot.lane.b32.xlu0 %v117, 90
    %v119 = vpop.permute.xlu0 %118
    %vm120 = vcmask 15360
    %s121 = scalar_lea.vmem %s1, 19
    %122 = vst.msk [vmem:[%s121] sm:$0x1] %vm120, %v119
    %v123 = vld [vmem:[#allocation0] sm:$0x1]
    %124 = vrot.lane.b32.xlu0 %v123, 88
    %v125 = vpop.permute.xlu0 %124
    %vm126 = vcmask 15360
    %s127 = scalar_lea.vmem %s1, 20
    %128 = vst.msk [vmem:[%s127] sm:$0x1] %vm126, %v125
    %v129 = vld [vmem:[#allocation0] sm:$0x1]
    %130 = vrot.lane.b32.xlu0 %v129, 86
    %v131 = vpop.permute.xlu0 %130
    %vm132 = vcmask 15360
    %s133 = scalar_lea.vmem %s1, 21
    %134 = vst.msk [vmem:[%s133] sm:$0x1] %vm132, %v131
    %v135 = vld [vmem:[#allocation0] sm:$0x1]
    %136 = vrot.lane.b32.xlu0 %v135, 84
    %v137 = vpop.permute.xlu0 %136
    %vm138 = vcmask 15360
    %s139 = scalar_lea.vmem %s1, 22
    %140 = vst.msk [vmem:[%s139] sm:$0x1] %vm138, %v137
    %v141 = vld [vmem:[#allocation0] sm:$0x1]
    %142 = vrot.lane.b32.xlu0 %v141, 82
    %v143 = vpop.permute.xlu0 %142
    %vm144 = vcmask 15360
    %s145 = scalar_lea.vmem %s1, 23
    %146 = vst.msk [vmem:[%s145] sm:$0x1] %vm144, %v143
    %v147 = vld [vmem:[#allocation0] sm:$0x1]
    %148 = vrot.lane.b32.xlu0 %v147, 80
    %v149 = vpop.permute.xlu0 %148
    %vm150 = vcmask 15360
    %s151 = scalar_lea.vmem %s1, 24
    %152 = vst.msk [vmem:[%s151] sm:$0x1] %vm150, %v149
    %v153 = vld [vmem:[#allocation0] sm:$0x1]
    %154 = vrot.lane.b32.xlu0 %v153, 78
    %v155 = vpop.permute.xlu0 %154
    %vm156 = vcmask 15360
    %s157 = scalar_lea.vmem %s1, 25
    %158 = vst.msk [vmem:[%s157] sm:$0x1] %vm156, %v155
    %v159 = vld [vmem:[#allocation0] sm:$0x1]
    %160 = vrot.lane.b32.xlu0 %v159, 76
    %v161 = vpop.permute.xlu0 %160
    %vm162 = vcmask 15360
    %s163 = scalar_lea.vmem %s1, 26
    %164 = vst.msk [vmem:[%s163] sm:$0x1] %vm162, %v161
    %v165 = vld [vmem:[#allocation0] sm:$0x1]
    %166 = vrot.lane.b32.xlu0 %v165, 74
    %v167 = vpop.permute.xlu0 %166
    %vm168 = vcmask 15360
    %s169 = scalar_lea.vmem %s1, 27
    %170 = vst.msk [vmem:[%s169] sm:$0x1] %vm168, %v167
    %v171 = vld [vmem:[#allocation0] sm:$0x1]
    %172 = vrot.lane.b32.xlu0 %v171, 72
    %v173 = vpop.permute.xlu0 %172
    %vm174 = vcmask 15360
    %s175 = scalar_lea.vmem %s1, 28
    %176 = vst.msk [vmem:[%s175] sm:$0x1] %vm174, %v173
    %v177 = vld [vmem:[#allocation0] sm:$0x1]
    %178 = vrot.lane.b32.xlu0 %v177, 70
    %v179 = vpop.permute.xlu0 %178
    %vm180 = vcmask 15360
    %s181 = scalar_lea.vmem %s1, 29
    %182 = vst.msk [vmem:[%s181] sm:$0x1] %vm180, %v179
    %v183 = vld [vmem:[#allocation0] sm:$0x1]
    %184 = vrot.lane.b32.xlu0 %v183, 68
    %v185 = vpop.permute.xlu0 %184
    %vm186 = vcmask 15360
    %s187 = scalar_lea.vmem %s1, 30
    %188 = vst.msk [vmem:[%s187] sm:$0x1] %vm186, %v185
    %v189 = vld [vmem:[#allocation0] sm:$0x1]
    %190 = vrot.lane.b32.xlu0 %v189, 66
    %v191 = vpop.permute.xlu0 %190
    %vm192 = vcmask 15360
    %s193 = scalar_lea.vmem %s1, 31
    %194 = vst.msk [vmem:[%s193] sm:$0x1] %vm192, %v191
    %v195 = vld [vmem:[#allocation0] sm:$0x1]
    %196 = vrot.lane.b32.xlu0 %v195, 64
    %v197 = vpop.permute.xlu0 %196
    %vm198 = vcmask 15360
    %s199 = scalar_lea.vmem %s1, 32
    %200 = vst.msk [vmem:[%s199] sm:$0x1] %vm198, %v197
    %v201 = vld [vmem:[#allocation0] sm:$0x1]
    %202 = vrot.lane.b32.xlu0 %v201, 62
    %v203 = vpop.permute.xlu0 %202
    %vm204 = vcmask 15360
    %s205 = scalar_lea.vmem %s1, 33
    %206 = vst.msk [vmem:[%s205] sm:$0x1] %vm204, %v203
    %v207 = vld [vmem:[#allocation0] sm:$0x1]
    %208 = vrot.lane.b32.xlu0 %v207, 60
    %v209 = vpop.permute.xlu0 %208
    %vm210 = vcmask 15360
    %s211 = scalar_lea.vmem %s1, 34
    %212 = vst.msk [vmem:[%s211] sm:$0x1] %vm210, %v209
    %v213 = vld [vmem:[#allocation0] sm:$0x1]
    %214 = vrot.lane.b32.xlu0 %v213, 58
    %v215 = vpop.permute.xlu0 %214
    %vm216 = vcmask 15360
    %s217 = scalar_lea.vmem %s1, 35
    %218 = vst.msk [vmem:[%s217] sm:$0x1] %vm216, %v215
    %v219 = vld [vmem:[#allocation0] sm:$0x1]
    %220 = vrot.lane.b32.xlu0 %v219, 56
    %v221 = vpop.permute.xlu0 %220
    %vm222 = vcmask 15360
    %s223 = scalar_lea.vmem %s1, 36
    %224 = vst.msk [vmem:[%s223] sm:$0x1] %vm222, %v221
    %v225 = vld [vmem:[#allocation0] sm:$0x1]
    %226 = vrot.lane.b32.xlu0 %v225, 54
    %v227 = vpop.permute.xlu0 %226
    %vm228 = vcmask 15360
    %s229 = scalar_lea.vmem %s1, 37
    %230 = vst.msk [vmem:[%s229] sm:$0x1] %vm228, %v227
    %v231 = vld [vmem:[#allocation0] sm:$0x1]
    %232 = vrot.lane.b32.xlu0 %v231, 52
    %v233 = vpop.permute.xlu0 %232
    %vm234 = vcmask 15360
    %s235 = scalar_lea.vmem %s1, 38
    %236 = vst.msk [vmem:[%s235] sm:$0x1] %vm234, %v233
    %v237 = vld [vmem:[#allocation0] sm:$0x1]
    %238 = vrot.lane.b32.xlu0 %v237, 50
    %v239 = vpop.permute.xlu0 %238
    %vm240 = vcmask 15360
    %s241 = scalar_lea.vmem %s1, 39
    %242 = vst.msk [vmem:[%s241] sm:$0x1] %vm240, %v239
    %v243 = vld [vmem:[#allocation0] sm:$0x1]
    %244 = vrot.lane.b32.xlu0 %v243, 48
    %v245 = vpop.permute.xlu0 %244
    %vm246 = vcmask 15360
    %s247 = scalar_lea.vmem %s1, 40
    %248 = vst.msk [vmem:[%s247] sm:$0x1] %vm246, %v245
    %v249 = vld [vmem:[#allocation0] sm:$0x1]
    %250 = vrot.lane.b32.xlu0 %v249, 46
    %v251 = vpop.permute.xlu0 %250
    %vm252 = vcmask 15360
    %s253 = scalar_lea.vmem %s1, 41
    %254 = vst.msk [vmem:[%s253] sm:$0x1] %vm252, %v251
    %v255 = vld [vmem:[#allocation0] sm:$0x1]
    %256 = vrot.lane.b32.xlu0 %v255, 44
    %v257 = vpop.permute.xlu0 %256
    %vm258 = vcmask 15360
    %s259 = scalar_lea.vmem %s1, 42
    %260 = vst.msk [vmem:[%s259] sm:$0x1] %vm258, %v257
    %v261 = vld [vmem:[#allocation0] sm:$0x1]
    %262 = vrot.lane.b32.xlu0 %v261, 42
    %v263 = vpop.permute.xlu0 %262
    %vm264 = vcmask 15360
    %s265 = scalar_lea.vmem %s1, 43
    %266 = vst.msk [vmem:[%s265] sm:$0x1] %vm264, %v263
    %v267 = vld [vmem:[#allocation0] sm:$0x1]
    %268 = vrot.lane.b32.xlu0 %v267, 40
    %v269 = vpop.permute.xlu0 %268
    %vm270 = vcmask 15360
    %s271 = scalar_lea.vmem %s1, 44
    %272 = vst.msk [vmem:[%s271] sm:$0x1] %vm270, %v269
    %v273 = vld [vmem:[#allocation0] sm:$0x1]
    %274 = vrot.lane.b32.xlu0 %v273, 38
    %v275 = vpop.permute.xlu0 %274
    %vm276 = vcmask 15360
    %s277 = scalar_lea.vmem %s1, 45
    %278 = vst.msk [vmem:[%s277] sm:$0x1] %vm276, %v275
    %v279 = vld [vmem:[#allocation0] sm:$0x1]
    %280 = vrot.lane.b32.xlu0 %v279, 36
    %v281 = vpop.permute.xlu0 %280
    %vm282 = vcmask 15360
    %s283 = scalar_lea.vmem %s1, 46
    %284 = vst.msk [vmem:[%s283] sm:$0x1] %vm282, %v281
    %v285 = vld [vmem:[#allocation0] sm:$0x1]
    %286 = vrot.lane.b32.xlu0 %v285, 34
    %v287 = vpop.permute.xlu0 %286
    %vm288 = vcmask 15360
    %s289 = scalar_lea.vmem %s1, 47
    %290 = vst.msk [vmem:[%s289] sm:$0x1] %vm288, %v287
    %v291 = vld [vmem:[#allocation0] sm:$0x1]
    %292 = vrot.lane.b32.xlu0 %v291, 32
    %v293 = vpop.permute.xlu0 %292
    %vm294 = vcmask 15360
    %s295 = scalar_lea.vmem %s1, 48
    %296 = vst.msk [vmem:[%s295] sm:$0x1] %vm294, %v293
    %v297 = vld [vmem:[#allocation0] sm:$0x1]
    %298 = vrot.lane.b32.xlu0 %v297, 30
    %v299 = vpop.permute.xlu0 %298
    %vm300 = vcmask 15360
    %s301 = scalar_lea.vmem %s1, 49
    %302 = vst.msk [vmem:[%s301] sm:$0x1] %vm300, %v299
    %v303 = vld [vmem:[#allocation0] sm:$0x1]
    %304 = vrot.lane.b32.xlu0 %v303, 28
    %v305 = vpop.permute.xlu0 %304
    %vm306 = vcmask 15360
    %s307 = scalar_lea.vmem %s1, 50
    %308 = vst.msk [vmem:[%s307] sm:$0x1] %vm306, %v305
    %v309 = vld [vmem:[#allocation0] sm:$0x1]
    %310 = vrot.lane.b32.xlu0 %v309, 26
    %v311 = vpop.permute.xlu0 %310
    %vm312 = vcmask 15360
    %s313 = scalar_lea.vmem %s1, 51
    %314 = vst.msk [vmem:[%s313] sm:$0x1] %vm312, %v311
    %v315 = vld [vmem:[#allocation0] sm:$0x1]
    %316 = vrot.lane.b32.xlu0 %v315, 24
    %v317 = vpop.permute.xlu0 %316
    %vm318 = vcmask 15360
    %s319 = scalar_lea.vmem %s1, 52
    %320 = vst.msk [vmem:[%s319] sm:$0x1] %vm318, %v317
    %v321 = vld [vmem:[#allocation0] sm:$0x1]
    %322 = vrot.lane.b32.xlu0 %v321, 22
    %v323 = vpop.permute.xlu0 %322
    %vm324 = vcmask 15360
    %s325 = scalar_lea.vmem %s1, 53
    %326 = vst.msk [vmem:[%s325] sm:$0x1] %vm324, %v323
    %v327 = vld [vmem:[#allocation0] sm:$0x1]
    %328 = vrot.lane.b32.xlu0 %v327, 20
    %v329 = vpop.permute.xlu0 %328
    %vm330 = vcmask 15360
    %s331 = scalar_lea.vmem %s1, 54
    %332 = vst.msk [vmem:[%s331] sm:$0x1] %vm330, %v329
    %v333 = vld [vmem:[#allocation0] sm:$0x1]
    %334 = vrot.lane.b32.xlu0 %v333, 18
    %v335 = vpop.permute.xlu0 %334
    %vm336 = vcmask 15360
    %s337 = scalar_lea.vmem %s1, 55
    %338 = vst.msk [vmem:[%s337] sm:$0x1] %vm336, %v335
    %v339 = vld [vmem:[#allocation0] sm:$0x1]
    %340 = vrot.lane.b32.xlu0 %v339, 16
    %v341 = vpop.permute.xlu0 %340
    %vm342 = vcmask 15360
    %s343 = scalar_lea.vmem %s1, 56
    %344 = vst.msk [vmem:[%s343] sm:$0x1] %vm342, %v341
    %v345 = vld [vmem:[#allocation0] sm:$0x1]
    %346 = vrot.lane.b32.xlu0 %v345, 14
    %v347 = vpop.permute.xlu0 %346
    %vm348 = vcmask 15360
    %s349 = scalar_lea.vmem %s1, 57
    %350 = vst.msk [vmem:[%s349] sm:$0x1] %vm348, %v347
    %v351 = vld [vmem:[#allocation0] sm:$0x1]
    %352 = vrot.lane.b32.xlu0 %v351, 12
    %v353 = vpop.permute.xlu0 %352
    %vm354 = vcmask 15360
    %s355 = scalar_lea.vmem %s1, 58
    %356 = vst.msk [vmem:[%s355] sm:$0x1] %vm354, %v353
    %v357 = vld [vmem:[#allocation0] sm:$0x1]
    %358 = vrot.lane.b32.xlu0 %v357, 10
    %v359 = vpop.permute.xlu0 %358
    %vm360 = vcmask 15360
    %s361 = scalar_lea.vmem %s1, 59
    %362 = vst.msk [vmem:[%s361] sm:$0x1] %vm360, %v359
    %v363 = vld [vmem:[#allocation0] sm:$0x1]
    %364 = vrot.lane.b32.xlu0 %v363, 8
    %v365 = vpop.permute.xlu0 %364
    %vm366 = vcmask 15360
    %s367 = scalar_lea.vmem %s1, 60
    %368 = vst.msk [vmem:[%s367] sm:$0x1] %vm366, %v365
    %v369 = vld [vmem:[#allocation0] sm:$0x1]
    %370 = vrot.lane.b32.xlu0 %v369, 6
    %v371 = vpop.permute.xlu0 %370
    %vm372 = vcmask 15360
    %s373 = scalar_lea.vmem %s1, 61
    %374 = vst.msk [vmem:[%s373] sm:$0x1] %vm372, %v371
    %v375 = vld [vmem:[#allocation0] sm:$0x1]
    %376 = vrot.lane.b32.xlu0 %v375, 4
    %v377 = vpop.permute.xlu0 %376
    %vm378 = vcmask 15360
    %s379 = scalar_lea.vmem %s1, 62
    %380 = vst.msk [vmem:[%s379] sm:$0x1] %vm378, %v377
    %v381 = vld [vmem:[#allocation0] sm:$0x1]
    %382 = vrot.lane.b32.xlu0 %v381, 2
    %v383 = vpop.permute.xlu0 %382
    %vm384 = vcmask 15360
    %s385 = scalar_lea.vmem %s1, 63
    %386 = vst.msk [vmem:[%s385] sm:$0x1] %vm384, %v383

// kernel: dgcn_forward.1
$region0: #{dgcn_forward.1}
  #allocation0 [shape = 'u32[]', space=smem, size = 0x4, offset = 0x4, fixed_abs, tag = 'smem constant byte address 0x4 - core index']
  #allocation1 [shape = 'u32[72,128]{1,0:T(1,128)}', space=vmem, size = 0x9000, scoped, tag = 'internal scratch']
  %s0 = inlined_call_operand.vmem [shape: f32[4,128], index: 0, kind: input, shape index: {}]
  %s1 = inlined_call_operand.vmem [shape: f32[32,4], index: 1, kind: input, shape index: {}]
  %s2 = inlined_call_operand.vmem [shape: f32[32,16], index: 2, kind: input, shape index: {}]
  %s3 = inlined_call_operand.vmem [shape: f32[64,16], index: 3, kind: input, shape index: {}]
  %s4 = inlined_call_operand.vmem [shape: f32[64,32], index: 4, kind: input, shape index: {}]
  %s5 = inlined_call_operand.vmem [shape: f32[8,96], index: 5, kind: input, shape index: {}]
  %s6 = inlined_call_operand.vmem [shape: f32[208,2], index: 6, kind: input, shape index: {}]
  %s7 = inlined_call_operand.vmem [shape: f32[8,128], index: 7, kind: output, shape index: {}]
  %s8 = sld [smem:[#allocation0]]
  $region38: #{dgcn_forward.1} parent=0
    _
  %s10 = ssub.s32 1, %s8
  %s11 = scalar_select 0, %s10, %s8
  // Predicated region
  $region2: #{dgcn_forward.1} parent=0 // pred_check
    _
  $region3: #{dgcn_forward.1} parent=0 // pred_check_branch
    %13 = sbr.rel (0) target = $region5
  $region4: #{dgcn_forward.1} parent=0 // pred_region
    _
  $region5: #{dgcn_forward.1} parent=0 // pred_fallthru
    _
  // Predicated region
  $region6: #{dgcn_forward.1} parent=0 // pred_check
    _
  $region7: #{dgcn_forward.1} parent=0 // pred_check_branch
    %15 = sbr.rel (0) target = $region9
  $region8: #{dgcn_forward.1} parent=0 // pred_region
    _
  $region9: #{dgcn_forward.1} parent=0 // pred_fallthru
    _
  // Predicated region
  $region10: #{dgcn_forward.1} parent=0 // pred_check
    _
  $region11: #{dgcn_forward.1} parent=0 // pred_check_branch
    %17 = sbr.rel (0) target = $region13
  $region12: #{dgcn_forward.1} parent=0 // pred_region
    _
  $region13: #{dgcn_forward.1} parent=0 // pred_fallthru
    _
  // Predicated region
  $region14: #{dgcn_forward.1} parent=0 // pred_check
    _
  $region15: #{dgcn_forward.1} parent=0 // pred_check_branch
    %19 = sbr.rel (0) target = $region17
  $region16: #{dgcn_forward.1} parent=0 // pred_region
    _
  $region17: #{dgcn_forward.1} parent=0 // pred_fallthru
    _
  // Predicated region
  $region18: #{dgcn_forward.1} parent=0 // pred_check
    _
  $region19: #{dgcn_forward.1} parent=0 // pred_check_branch
    %21 = sbr.rel (0) target = $region21
  $region20: #{dgcn_forward.1} parent=0 // pred_region
    _
  $region21: #{dgcn_forward.1} parent=0 // pred_fallthru
    _
  // Predicated region
  $region22: #{dgcn_forward.1} parent=0 // pred_check
    _
  $region23: #{dgcn_forward.1} parent=0 // pred_check_branch
    %23 = sbr.rel (0) target = $region25
  $region24: #{dgcn_forward.1} parent=0 // pred_region
    _
  $region25: #{dgcn_forward.1} parent=0 // pred_fallthru
    _
  // Predicated region
  $region26: #{dgcn_forward.1} parent=0 // pred_check
    _
  $region27: #{dgcn_forward.1} parent=0 // pred_check_branch
    %25 = sbr.rel (0) target = $region29
  $region28: #{dgcn_forward.1} parent=0 // pred_region
    _
  $region29: #{dgcn_forward.1} parent=0 // pred_fallthru
    _
  %v26 = vld [vmem:[%s0] sm:$0xf]
  %v27 = vld [vmem:[%s1] sm:$0xff]
  %v28 = vld [vmem:[%s1 + $0x8] sm:$0xff]
  %v29 = vld [vmem:[%s1 + $0x10] sm:$0xff]
  %v30 = vld [vmem:[%s1 + $0x18] sm:$0xff]
  %vm31 = vcmask 31744
  %v33 = vsel %vm31, %v27, 0
  %v36 = vsel %vm31, %v28, 0
  %v39 = vsel %vm31, %v29, 0
  %v42 = vsel %vm31, %v30, 0
  %vm44 = vcmask 1043456
  %v46 = vsel %vm44, %v26, 0
  %48 = vmatpush.msra.mxu0 0.0
  %49 = vmatpush.msra.mxu0 0.0
  %50 = vmatpush.msra.mxu0 0.0
  %51 = vmatpush.msra.mxu0 0.0
  %52 = vmatpush.msra.mxu0 0.0
  %53 = vmatpush.msra.mxu0 0.0
  %54 = vmatpush.msra.mxu0 0.0
  %55 = vmatpush.msra.mxu0 0.0
  %56 = vmatpush.msra.mxu0 0.0
  %57 = vmatpush.msra.mxu0 0.0
  %58 = vmatpush.msra.mxu0 0.0
  %59 = vmatpush.msra.mxu0 0.0
  %60 = vmatpush.msra.mxu0 0.0
  %61 = vmatpush.msra.mxu0 0.0
  %62 = vmatpush.msra.mxu0 0.0
  %63 = vmatpush.msra.mxu0 %v46
  %64 = vmatmul.f32.gmra.mxu0 %v33
  %v65 = vpop.f32.mrf.mxu0
  %v66 = vadd.f32 0.0, %v65
  %67 = vmatmul.f32.gmra.mxu0 %v36
  %v68 = vpop.f32.mrf.mxu0
  %v69 = vadd.f32 0.0, %v68
  %70 = vmatmul.f32.gmra.mxu0 %v39
  %v71 = vpop.f32.mrf.mxu0
  %v72 = vadd.f32 0.0, %v71
  %73 = vmatmul.f32.gmra.mxu0 %v42
  %v74 = vpop.f32.mrf.mxu0
  %v75 = vadd.f32 0.0, %v74
  %76 = vdwg.mxu0
  %v77 = vld [vmem:[%s6] sm:$0xff]
  %v78 = vld [vmem:[%s6 + $0x8] sm:$0xff]
  %v79 = vld [vmem:[%s6 + $0x10] sm:$0xff]
  %v80 = vld [vmem:[%s6 + $0x18] sm:$0xff]
  %81 = vadd.xlane.f32.xlu0 %v66
  %v82 = vpop.xlane.xlu0 %81
  %83 = vadd.xlane.f32.xlu0 %v69
  %v84 = vpop.xlane.xlu0 %83
  %v85 = vrcp.pop 128.0
  %v86 = vmul.f32 128.0, %v85
  %v87 = vsub.f32 1.0, %v86
  %v88 = vmul.f32 %v85, %v87
  %v89 = vadd.f32 %v85, %v88
  %vm90 = vweird.f32 %v85
  %v91 = vsel %vm90, %v85, %v89
  %v92 = vmul.f32 %v82, %v91
  %v93 = vmul.f32 %v84, %v91
  %v94 = vsub.f32 %v66, %v92
  %v95 = vsub.f32 %v69, %v93
  %v96 = vmul.f32 %v94, %v94
  %v97 = vmul.f32 %v95, %v95
  %98 = vadd.xlane.f32.xlu0 %v96
  %v99 = vpop.xlane.xlu0 %98
  %100 = vadd.xlane.f32.xlu0 %v97
  %v101 = vpop.xlane.xlu0 %100
  %v102 = vmul.f32 %v99, %v91
  %v103 = vmul.f32 %v101, %v91
  %v104 = vadd.f32 %v102, 1e-05
  %v105 = vadd.f32 %v103, 1e-05
  %v106 = vrsqrt.pop %v104
  %v107 = vmul.f32 %v106, %v104
  %v108 = vmul.f32 %v107, %v106
  %v109 = vmul.f32 0.5, %v108
  %v110 = vsub.f32 1.5, %v109
  %v111 = vmul.f32 %v106, %v110
  %vm112 = vweird.f32 %v104
  %vm113 = vweird.f32 %v106
  %vm114 = vmor %vm112, %vm113
  %v115 = vsel %vm114, %v106, %v111
  %v116 = vrsqrt.pop %v105
  %v117 = vmul.f32 %v116, %v105
  %v118 = vmul.f32 %v117, %v116
  %v119 = vmul.f32 0.5, %v118
  %v120 = vsub.f32 1.5, %v119
  %v121 = vmul.f32 %v116, %v120
  %vm122 = vweird.f32 %v105
  %vm123 = vweird.f32 %v116
  %vm124 = vmor %vm122, %vm123
  %v125 = vsel %vm124, %v116, %v121
  %v126 = vmul.f32 %v77, %v115
  %v127 = vmul.f32 %v78, %v125
  %129 = vset.pattern.permute.xlu0 0
  %130 = vperm.xlu0 %129, %v126
  %v131 = vpop.permute.xlu0 %130
  %134 = vset.pattern.permute.xlu0 0
  %135 = vperm.xlu0 %134, %v127
  %v136 = vpop.permute.xlu0 %135
  %v138 = vmul.f32 %v94, %v131
  %v139 = vmul.f32 %v95, %v136
  %141 = vset.pattern.permute.xlu0 1
  %142 = vperm.xlu0 %141, %v77
  %v143 = vpop.permute.xlu0 %142
  %146 = vset.pattern.permute.xlu0 1
  %147 = vperm.xlu0 %146, %v78
  %v148 = vpop.permute.xlu0 %147
  %v150 = vadd.f32 %v138, %v143
  %v151 = vadd.f32 %v139, %v148
  %v152 = vmul.f32 %v150, 0.2
  %v153 = vmul.f32 %v151, 0.2
  %v154 = vmax.f32 %v150, %v152
  %v155 = vmax.f32 %v151, %v153
  %156 = vrot.lane.b32.xlu0 %v72, 2
  %v157 = vpop.permute.xlu0 %156
  %158 = vrot.lane.b32.xlu0 %v75, 2
  %v159 = vpop.permute.xlu0 %158
  %v160 = vsub.f32 %v157, %v72
  %v161 = vsub.f32 %v159, %v75
  %162 = vrot.lane.b32.xlu0 %v72, 4
  %v163 = vpop.permute.xlu0 %162
  %164 = vrot.lane.b32.xlu0 %v75, 4
  %v165 = vpop.permute.xlu0 %164
  %v166 = vsub.f32 %v163, %v72
  %v167 = vsub.f32 %v165, %v75
  %168 = vrot.lane.b32.xlu0 %v72, 6
  %v169 = vpop.permute.xlu0 %168
  %170 = vrot.lane.b32.xlu0 %v75, 6
  %v171 = vpop.permute.xlu0 %170
  %v172 = vsub.f32 %v169, %v72
  %v173 = vsub.f32 %v171, %v75
  %174 = vrot.lane.b32.xlu0 %v72, 8
  %v175 = vpop.permute.xlu0 %174
  %176 = vrot.lane.b32.xlu0 %v75, 8
  %v177 = vpop.permute.xlu0 %176
  %v178 = vsub.f32 %v175, %v72
  %v179 = vsub.f32 %v177, %v75
  %180 = vrot.lane.b32.xlu0 %v72, 126
  %v181 = vpop.permute.xlu0 %180
  %182 = vrot.lane.b32.xlu0 %v75, 126
  %v183 = vpop.permute.xlu0 %182
  %v184 = vsub.f32 %v181, %v72
  %v185 = vsub.f32 %v183, %v75
  %186 = vrot.lane.b32.xlu0 %v72, 124
  %v187 = vpop.permute.xlu0 %186
  %188 = vrot.lane.b32.xlu0 %v75, 124
  %v189 = vpop.permute.xlu0 %188
  %v190 = vsub.f32 %v187, %v72
  %v191 = vsub.f32 %v189, %v75
  %192 = vrot.lane.b32.xlu0 %v72, 122
  %v193 = vpop.permute.xlu0 %192
  %194 = vrot.lane.b32.xlu0 %v75, 122
  %v195 = vpop.permute.xlu0 %194
  %v196 = vsub.f32 %v193, %v72
  %v197 = vsub.f32 %v195, %v75
  %198 = vrot.lane.b32.xlu0 %v72, 120
  %v199 = vpop.permute.xlu0 %198
  %200 = vrot.lane.b32.xlu0 %v75, 120
  %v201 = vpop.permute.xlu0 %200
  %v202 = vsub.f32 %v199, %v72
  %v203 = vsub.f32 %v201, %v75
  %204 = vadd.xlane.f32.xlu0 %v160
  %v205 = vpop.xlane.xlu0 %204
  %206 = vadd.xlane.f32.xlu0 %v161
  %v207 = vpop.xlane.xlu0 %206
  %v208 = vadd.f32 %v205, 0.0
  %v209 = vadd.f32 %v207, 0.0
  %210 = vadd.xlane.f32.xlu0 %v166
  %v211 = vpop.xlane.xlu0 %210
  %212 = vadd.xlane.f32.xlu0 %v167
  %v213 = vpop.xlane.xlu0 %212
  %v214 = vadd.f32 %v208, %v211
  %v215 = vadd.f32 %v209, %v213
  %216 = vadd.xlane.f32.xlu0 %v172
  %v217 = vpop.xlane.xlu0 %216
  %218 = vadd.xlane.f32.xlu0 %v173
  %v219 = vpop.xlane.xlu0 %218
  %v220 = vadd.f32 %v214, %v217
  %v221 = vadd.f32 %v215, %v219
  %222 = vadd.xlane.f32.xlu0 %v178
  %v223 = vpop.xlane.xlu0 %222
  %224 = vadd.xlane.f32.xlu0 %v179
  %v225 = vpop.xlane.xlu0 %224
  %v226 = vadd.f32 %v220, %v223
  %v227 = vadd.f32 %v221, %v225
  %228 = vadd.xlane.f32.xlu0 %v184
  %v229 = vpop.xlane.xlu0 %228
  %230 = vadd.xlane.f32.xlu0 %v185
  %v231 = vpop.xlane.xlu0 %230
  %v232 = vadd.f32 %v226, %v229
  %v233 = vadd.f32 %v227, %v231
  %234 = vadd.xlane.f32.xlu0 %v190
  %v235 = vpop.xlane.xlu0 %234
  %236 = vadd.xlane.f32.xlu0 %v191
  %v237 = vpop.xlane.xlu0 %236
  %v238 = vadd.f32 %v232, %v235
  %v239 = vadd.f32 %v233, %v237
  %240 = vadd.xlane.f32.xlu0 %v196
  %v241 = vpop.xlane.xlu0 %240
  %242 = vadd.xlane.f32.xlu0 %v197
  %v243 = vpop.xlane.xlu0 %242
  %v244 = vadd.f32 %v238, %v241
  %v245 = vadd.f32 %v239, %v243
  %246 = vadd.xlane.f32.xlu0 %v202
  %v247 = vpop.xlane.xlu0 %246
  %248 = vadd.xlane.f32.xlu0 %v203
  %v249 = vpop.xlane.xlu0 %248
  %v250 = vadd.f32 %v244, %v247
  %v251 = vadd.f32 %v245, %v249
  %v252 = vmul.f32 %v250, 0.0009765625
  %v253 = vmul.f32 %v251, 0.0009765625
  %v254 = vsub.f32 %v160, %v252
  %v255 = vsub.f32 %v161, %v253
  %v256 = vmul.f32 %v254, %v254
  %v257 = vmul.f32 %v255, %v255
  %258 = vadd.xlane.f32.xlu0 %v256
  %v259 = vpop.xlane.xlu0 %258
  %260 = vadd.xlane.f32.xlu0 %v257
  %v261 = vpop.xlane.xlu0 %260
  %v262 = vadd.f32 %v259, 0.0
  %v263 = vadd.f32 %v261, 0.0
  %v264 = vsub.f32 %v166, %v252
  %v265 = vsub.f32 %v167, %v253
  %v266 = vmul.f32 %v264, %v264
  %v267 = vmul.f32 %v265, %v265
  %268 = vadd.xlane.f32.xlu0 %v266
  %v269 = vpop.xlane.xlu0 %268
  %270 = vadd.xlane.f32.xlu0 %v267
  %v271 = vpop.xlane.xlu0 %270
  %v272 = vadd.f32 %v262, %v269
  %v273 = vadd.f32 %v263, %v271
  %v274 = vsub.f32 %v172, %v252
  %v275 = vsub.f32 %v173, %v253
  %v276 = vmul.f32 %v274, %v274
  %v277 = vmul.f32 %v275, %v275
  %278 = vadd.xlane.f32.xlu0 %v276
  %v279 = vpop.xlane.xlu0 %278
  %280 = vadd.xlane.f32.xlu0 %v277
  %v281 = vpop.xlane.xlu0 %280
  %v282 = vadd.f32 %v272, %v279
  %v283 = vadd.f32 %v273, %v281
  %v284 = vsub.f32 %v178, %v252
  %v285 = vsub.f32 %v179, %v253
  %v286 = vmul.f32 %v284, %v284
  %v287 = vmul.f32 %v285, %v285
  %288 = vadd.xlane.f32.xlu0 %v286
  %v289 = vpop.xlane.xlu0 %288
  %290 = vadd.xlane.f32.xlu0 %v287
  %v291 = vpop.xlane.xlu0 %290
  %v292 = vadd.f32 %v282, %v289
  %v293 = vadd.f32 %v283, %v291
  %v294 = vsub.f32 %v184, %v252
  %v295 = vsub.f32 %v185, %v253
  %v296 = vmul.f32 %v294, %v294
  %v297 = vmul.f32 %v295, %v295
  %298 = vadd.xlane.f32.xlu0 %v296
  %v299 = vpop.xlane.xlu0 %298
  %300 = vadd.xlane.f32.xlu0 %v297
  %v301 = vpop.xlane.xlu0 %300
  %v302 = vadd.f32 %v292, %v299
  %v303 = vadd.f32 %v293, %v301
  %v304 = vsub.f32 %v190, %v252
  %v305 = vsub.f32 %v191, %v253
  %v306 = vmul.f32 %v304, %v304
  %v307 = vmul.f32 %v305, %v305
  %308 = vadd.xlane.f32.xlu0 %v306
  %v309 = vpop.xlane.xlu0 %308
  %310 = vadd.xlane.f32.xlu0 %v307
  %v311 = vpop.xlane.xlu0 %310
  %v312 = vadd.f32 %v302, %v309
  %v313 = vadd.f32 %v303, %v311
  %v314 = vsub.f32 %v196, %v252
  %v315 = vsub.f32 %v197, %v253
  %v316 = vmul.f32 %v314, %v314
  %v317 = vmul.f32 %v315, %v315
  %318 = vadd.xlane.f32.xlu0 %v316
  %v319 = vpop.xlane.xlu0 %318
  %320 = vadd.xlane.f32.xlu0 %v317
  %v321 = vpop.xlane.xlu0 %320
  %v322 = vadd.f32 %v312, %v319
  %v323 = vadd.f32 %v313, %v321
  %v324 = vsub.f32 %v202, %v252
  %v325 = vsub.f32 %v203, %v253
  %v326 = vmul.f32 %v324, %v324
  %v327 = vmul.f32 %v325, %v325
  %328 = vadd.xlane.f32.xlu0 %v326
  %v329 = vpop.xlane.xlu0 %328
  %330 = vadd.xlane.f32.xlu0 %v327
  %v331 = vpop.xlane.xlu0 %330
  %v332 = vadd.f32 %v322, %v329
  %v333 = vadd.f32 %v323, %v331
  %v334 = vmul.f32 %v332, 0.0009765625
  %v335 = vmul.f32 %v333, 0.0009765625
  %v336 = vadd.f32 %v334, 1e-05
  %v337 = vadd.f32 %v335, 1e-05
  %v338 = vrsqrt.pop %v336
  %v339 = vmul.f32 %v338, %v336
  %v340 = vmul.f32 %v339, %v338
  %v341 = vmul.f32 0.5, %v340
  %v342 = vsub.f32 1.5, %v341
  %v343 = vmul.f32 %v338, %v342
  %vm344 = vweird.f32 %v336
  %vm345 = vweird.f32 %v338
  %vm346 = vmor %vm344, %vm345
  %v347 = vsel %vm346, %v338, %v343
  %v348 = vrsqrt.pop %v337
  %v349 = vmul.f32 %v348, %v337
  %v350 = vmul.f32 %v349, %v348
  %v351 = vmul.f32 0.5, %v350
  %v352 = vsub.f32 1.5, %v351
  %v353 = vmul.f32 %v348, %v352
  %vm354 = vweird.f32 %v337
  %vm355 = vweird.f32 %v348
  %vm356 = vmor %vm354, %vm355
  %v357 = vsel %vm356, %v348, %v353
  %v358 = vmul.f32 %v79, %v347
  %v359 = vmul.f32 %v80, %v357
  %v360 = vmul.f32 %v252, %v358
  %v361 = vmul.f32 %v253, %v359
  %364 = vrot.lane.b32.xlu0 %v360, 1
  %v365 = vpop.permute.xlu0 %364
  %366 = vrot.lane.b32.xlu0 %v361, 1
  %v367 = vpop.permute.xlu0 %366
  %v370 = vsub.f32 %v79, %v365
  %v371 = vsub.f32 %v80, %v367
  %373 = vset.pattern.permute.xlu0 0
  %374 = vperm.xlu0 %373, %v358
  %v375 = vpop.permute.xlu0 %374
  %378 = vset.pattern.permute.xlu0 0
  %379 = vperm.xlu0 %378, %v359
  %v380 = vpop.permute.xlu0 %379
  %v382 = vmul.f32 %v160, %v375
  %v383 = vmul.f32 %v161, %v380
  %385 = vset.pattern.permute.xlu0 1
  %386 = vperm.xlu0 %385, %v370
  %v387 = vpop.permute.xlu0 %386
  %390 = vset.pattern.permute.xlu0 1
  %391 = vperm.xlu0 %390, %v371
  %v392 = vpop.permute.xlu0 %391
  %v394 = vadd.f32 %v382, %v387
  %v395 = vadd.f32 %v383, %v392
  %v396 = vmul.f32 %v394, 0.2
  %v397 = vmul.f32 %v395, 0.2
  %v398 = vmax.f32 %v394, %v396
  %v399 = vmax.f32 %v395, %v397
  %v400 = vmul.f32 %v166, %v375
  %v401 = vmul.f32 %v167, %v380
  %v402 = vadd.f32 %v400, %v387
  %v403 = vadd.f32 %v401, %v392
  %v404 = vmul.f32 %v402, 0.2
  %v405 = vmul.f32 %v403, 0.2
  %v406 = vmax.f32 %v402, %v404
  %v407 = vmax.f32 %v403, %v405
  %v408 = vmax.f32 %v398, %v406
  %v409 = vmax.f32 %v399, %v407
  %v410 = vmul.f32 %v172, %v375
  %v411 = vmul.f32 %v173, %v380
  %v412 = vadd.f32 %v410, %v387
  %v413 = vadd.f32 %v411, %v392
  %v414 = vmul.f32 %v412, 0.2
  %v415 = vmul.f32 %v413, 0.2
  %v416 = vmax.f32 %v412, %v414
  %v417 = vmax.f32 %v413, %v415
  %v418 = vmax.f32 %v408, %v416
  %v419 = vmax.f32 %v409, %v417
  %v420 = vmul.f32 %v178, %v375
  %v421 = vmul.f32 %v179, %v380
  %v422 = vadd.f32 %v420, %v387
  %v423 = vadd.f32 %v421, %v392
  %v424 = vmul.f32 %v422, 0.2
  %v425 = vmul.f32 %v423, 0.2
  %v426 = vmax.f32 %v422, %v424
  %v427 = vmax.f32 %v423, %v425
  %v428 = vmax.f32 %v418, %v426
  %v429 = vmax.f32 %v419, %v427
  %v430 = vmul.f32 %v184, %v375
  %v431 = vmul.f32 %v185, %v380
  %v432 = vadd.f32 %v430, %v387
  %v433 = vadd.f32 %v431, %v392
  %v434 = vmul.f32 %v432, 0.2
  %v435 = vmul.f32 %v433, 0.2
  %v436 = vmax.f32 %v432, %v434
  %v437 = vmax.f32 %v433, %v435
  %v438 = vmax.f32 %v428, %v436
  %v439 = vmax.f32 %v429, %v437
  %v440 = vmul.f32 %v190, %v375
  %v441 = vmul.f32 %v191, %v380
  %v442 = vadd.f32 %v440, %v387
  %v443 = vadd.f32 %v441, %v392
  %v444 = vmul.f32 %v442, 0.2
  %v445 = vmul.f32 %v443, 0.2
  %v446 = vmax.f32 %v442, %v444
  %v447 = vmax.f32 %v443, %v445
  %v448 = vmax.f32 %v438, %v446
  %v449 = vmax.f32 %v439, %v447
  %v450 = vmul.f32 %v196, %v375
  %v451 = vmul.f32 %v197, %v380
  %v452 = vadd.f32 %v450, %v387
  %v453 = vadd.f32 %v451, %v392
  %v454 = vmul.f32 %v452, 0.2
  %v455 = vmul.f32 %v453, 0.2
  %v456 = vmax.f32 %v452, %v454
  %v457 = vmax.f32 %v453, %v455
  %v458 = vmax.f32 %v448, %v456
  %v459 = vmax.f32 %v449, %v457
  %v460 = vmul.f32 %v202, %v375
  %v461 = vmul.f32 %v203, %v380
  %v462 = vadd.f32 %v460, %v387
  %v463 = vadd.f32 %v461, %v392
  %v464 = vmul.f32 %v462, 0.2
  %v465 = vmul.f32 %v463, 0.2
  %v466 = vmax.f32 %v462, %v464
  %v467 = vmax.f32 %v463, %v465
  %v468 = vmax.f32 %v458, %v466
  %v469 = vmax.f32 %v459, %v467
  %v470 = vadd.f32 %v154, %v468
  %v471 = vadd.f32 %v155, %v469
  %v472 = vld [vmem:[%s2] sm:$0xff]
  %v473 = vld [vmem:[%s2 + $0x8] sm:$0xff]
  %v474 = vld [vmem:[%s2 + $0x10] sm:$0xff]
  %v475 = vld [vmem:[%s2 + $0x18] sm:$0xff]
  %vm476 = vcmask 130048
  %v478 = vsel %vm476, %v472, 0
  %v481 = vsel %vm476, %v473, 0
  %v484 = vsel %vm476, %v474, 0
  %v487 = vsel %vm476, %v475, 0
  %489 = vmatpush.msra.mxu0 0.0
  %490 = vmatpush.msra.mxu0 0.0
  %491 = vmatpush.msra.mxu0 0.0
  %492 = vmatpush.msra.mxu0 0.0
  %493 = vmatpush.msra.mxu0 0.0
  %494 = vmatpush.msra.mxu0 0.0
  %495 = vmatpush.msra.mxu0 0.0
  %496 = vmatpush.msra.mxu0 0.0
  %497 = vmatpush.msra.mxu0 0.0
  %498 = vmatpush.msra.mxu0 0.0
  %499 = vmatpush.msra.mxu0 0.0
  %500 = vmatpush.msra.mxu0 0.0
  %501 = vmatpush.msra.mxu0 0.0
  %502 = vmatpush.msra.mxu0 0.0
  %503 = vmatpush.msra.mxu0 %v471
  %504 = vmatpush.msra.mxu0 %v470
  %505 = vmatmul.f32.gmra.mxu0 %v478
  %v506 = vpop.f32.mrf.mxu0
  %v507 = vadd.f32 0.0, %v506
  %508 = vmatmul.f32.gmra.mxu0 %v481
  %v509 = vpop.f32.mrf.mxu0
  %v510 = vadd.f32 0.0, %v509
  %511 = vmatmul.f32.gmra.mxu0 %v484
  %v512 = vpop.f32.mrf.mxu0
  %v513 = vadd.f32 0.0, %v512
  %514 = vmatmul.f32.gmra.mxu0 %v487
  %v515 = vpop.f32.mrf.mxu0
  %v516 = vadd.f32 0.0, %v515
  %517 = vdwg.mxu0
  %v518 = vld [vmem:[%s6 + $0x20] sm:$0xff]
  %v519 = vld [vmem:[%s6 + $0x28] sm:$0xff]
  %v520 = vld [vmem:[%s6 + $0x30] sm:$0xff]
  %v521 = vld [vmem:[%s6 + $0x38] sm:$0xff]
  %522 = vadd.xlane.f32.xlu0 %v507
  %v523 = vpop.xlane.xlu0 %522
  %524 = vadd.xlane.f32.xlu0 %v510
  %v525 = vpop.xlane.xlu0 %524
  %526 = vadd.xlane.f32.xlu0 %v513
  %v527 = vpop.xlane.xlu0 %526
  %528 = vadd.xlane.f32.xlu0 %v516
  %v529 = vpop.xlane.xlu0 %528
  %v530 = vmul.f32 %v523, %v91
  %v531 = vmul.f32 %v525, %v91
  %v532 = vmul.f32 %v527, %v91
  %v533 = vmul.f32 %v529, %v91
  %v534 = vsub.f32 %v507, %v530
  %v535 = vsub.f32 %v510, %v531
  %v536 = vsub.f32 %v513, %v532
  %v537 = vsub.f32 %v516, %v533
  %v538 = vmul.f32 %v534, %v534
  %v539 = vmul.f32 %v535, %v535
  %v540 = vmul.f32 %v536, %v536
  %v541 = vmul.f32 %v537, %v537
  %542 = vadd.xlane.f32.xlu0 %v538
  %v543 = vpop.xlane.xlu0 %542
  %544 = vadd.xlane.f32.xlu0 %v539
  %v545 = vpop.xlane.xlu0 %544
  %546 = vadd.xlane.f32.xlu0 %v540
  %v547 = vpop.xlane.xlu0 %546
  %548 = vadd.xlane.f32.xlu0 %v541
  %v549 = vpop.xlane.xlu0 %548
  %v550 = vmul.f32 %v543, %v91
  %v551 = vmul.f32 %v545, %v91
  %v552 = vmul.f32 %v547, %v91
  %v553 = vmul.f32 %v549, %v91
  %v554 = vadd.f32 %v550, 1e-05
  %v555 = vadd.f32 %v551, 1e-05
  %v556 = vadd.f32 %v552, 1e-05
  %v557 = vadd.f32 %v553, 1e-05
  %v558 = vrsqrt.pop %v554
  %v559 = vmul.f32 %v558, %v554
  %v560 = vmul.f32 %v559, %v558
  %v561 = vmul.f32 0.5, %v560
  %v562 = vsub.f32 1.5, %v561
  %v563 = vmul.f32 %v558, %v562
  %vm564 = vweird.f32 %v554
  %vm565 = vweird.f32 %v558
  %vm566 = vmor %vm564, %vm565
  %v567 = vsel %vm566, %v558, %v563
  %v568 = vrsqrt.pop %v555
  %v569 = vmul.f32 %v568, %v555
  %v570 = vmul.f32 %v569, %v568
  %v571 = vmul.f32 0.5, %v570
  %v572 = vsub.f32 1.5, %v571
  %v573 = vmul.f32 %v568, %v572
  %vm574 = vweird.f32 %v555
  %vm575 = vweird.f32 %v568
  %vm576 = vmor %vm574, %vm575
  %v577 = vsel %vm576, %v568, %v573
  %v578 = vrsqrt.pop %v556
  %v579 = vmul.f32 %v578, %v556
  %v580 = vmul.f32 %v579, %v578
  %v581 = vmul.f32 0.5, %v580
  %v582 = vsub.f32 1.5, %v581
  %v583 = vmul.f32 %v578, %v582
  %vm584 = vweird.f32 %v556
  %vm585 = vweird.f32 %v578
  %vm586 = vmor %vm584, %vm585
  %v587 = vsel %vm586, %v578, %v583
  %v588 = vrsqrt.pop %v557
  %v589 = vmul.f32 %v588, %v557
  %v590 = vmul.f32 %v589, %v588
  %v591 = vmul.f32 0.5, %v590
  %v592 = vsub.f32 1.5, %v591
  %v593 = vmul.f32 %v588, %v592
  %vm594 = vweird.f32 %v557
  %vm595 = vweird.f32 %v588
  %vm596 = vmor %vm594, %vm595
  %v597 = vsel %vm596, %v588, %v593
  %v598 = vmul.f32 %v518, %v567
  %v599 = vmul.f32 %v519, %v577
  %v600 = vmul.f32 %v520, %v587
  %v601 = vmul.f32 %v521, %v597
  %603 = vset.pattern.permute.xlu0 0
  %604 = vperm.xlu0 %603, %v598
  %v605 = vpop.permute.xlu0 %604
  %608 = vset.pattern.permute.xlu0 0
  %609 = vperm.xlu0 %608, %v599
  %v610 = vpop.permute.xlu0 %609
  %613 = vset.pattern.permute.xlu0 0
  %614 = vperm.xlu0 %613, %v600
  %v615 = vpop.permute.xlu0 %614
  %618 = vset.pattern.permute.xlu0 0
  %619 = vperm.xlu0 %618, %v601
  %v620 = vpop.permute.xlu0 %619
  %v622 = vmul.f32 %v534, %v605
  %v623 = vmul.f32 %v535, %v610
  %v624 = vmul.f32 %v536, %v615
  %v625 = vmul.f32 %v537, %v620
  %627 = vset.pattern.permute.xlu0 1
  %628 = vperm.xlu0 %627, %v518
  %v629 = vpop.permute.xlu0 %628
  %632 = vset.pattern.permute.xlu0 1
  %633 = vperm.xlu0 %632, %v519
  %v634 = vpop.permute.xlu0 %633
  %637 = vset.pattern.permute.xlu0 1
  %638 = vperm.xlu0 %637, %v520
  %v639 = vpop.permute.xlu0 %638
  %642 = vset.pattern.permute.xlu0 1
  %643 = vperm.xlu0 %642, %v521
  %v644 = vpop.permute.xlu0 %643
  %v646 = vadd.f32 %v622, %v629
  %v647 = vadd.f32 %v623, %v634
  %v648 = vadd.f32 %v624, %v639
  %v649 = vadd.f32 %v625, %v644
  %v650 = vmul.f32 %v646, 0.2
  %v651 = vmul.f32 %v647, 0.2
  %v652 = vmul.f32 %v648, 0.2
  %v653 = vmul.f32 %v649, 0.2
  %v654 = vmax.f32 %v646, %v650
  %v655 = vmax.f32 %v647, %v651
  %v656 = vmax.f32 %v648, %v652
  %v657 = vmax.f32 %v649, %v653
  %658 = vrot.lane.b32.xlu0 %v656, 2
  %v659 = vpop.permute.xlu0 %658
  %660 = vrot.lane.b32.xlu0 %v657, 2
  %v661 = vpop.permute.xlu0 %660
  %662 = vrot.lane.b32.xlu0 %v656, 4
  %v663 = vpop.permute.xlu0 %662
  %664 = vrot.lane.b32.xlu0 %v657, 4
  %v665 = vpop.permute.xlu0 %664
  %v666 = vmax.f32 %v659, %v663
  %v667 = vmax.f32 %v661, %v665
  %668 = vrot.lane.b32.xlu0 %v656, 6
  %v669 = vpop.permute.xlu0 %668
  %670 = vrot.lane.b32.xlu0 %v657, 6
  %v671 = vpop.permute.xlu0 %670
  %v672 = vmax.f32 %v666, %v669
  %v673 = vmax.f32 %v667, %v671
  %674 = vrot.lane.b32.xlu0 %v656, 8
  %v675 = vpop.permute.xlu0 %674
  %676 = vrot.lane.b32.xlu0 %v657, 8
  %v677 = vpop.permute.xlu0 %676
  %v678 = vmax.f32 %v672, %v675
  %v679 = vmax.f32 %v673, %v677
  %680 = vrot.lane.b32.xlu0 %v656, 126
  %v681 = vpop.permute.xlu0 %680
  %682 = vrot.lane.b32.xlu0 %v657, 126
  %v683 = vpop.permute.xlu0 %682
  %v684 = vmax.f32 %v678, %v681
  %v685 = vmax.f32 %v679, %v683
  %686 = vrot.lane.b32.xlu0 %v656, 124
  %v687 = vpop.permute.xlu0 %686
  %688 = vrot.lane.b32.xlu0 %v657, 124
  %v689 = vpop.permute.xlu0 %688
  %v690 = vmax.f32 %v684, %v687
  %v691 = vmax.f32 %v685, %v689
  %692 = vrot.lane.b32.xlu0 %v656, 122
  %v693 = vpop.permute.xlu0 %692
  %694 = vrot.lane.b32.xlu0 %v657, 122
  %v695 = vpop.permute.xlu0 %694
  %v696 = vmax.f32 %v690, %v693
  %v697 = vmax.f32 %v691, %v695
  %698 = vrot.lane.b32.xlu0 %v656, 120
  %v699 = vpop.permute.xlu0 %698
  %700 = vrot.lane.b32.xlu0 %v657, 120
  %v701 = vpop.permute.xlu0 %700
  %v702 = vmax.f32 %v696, %v699
  %v703 = vmax.f32 %v697, %v701
  %v704 = vadd.f32 %v654, %v702
  %v705 = vadd.f32 %v655, %v703
  %v706 = vld [vmem:[%s3] sm:$0xff]
  %v707 = vld [vmem:[%s3 + $0x8] sm:$0xff]
  %v708 = vld [vmem:[%s3 + $0x10] sm:$0xff]
  %v709 = vld [vmem:[%s3 + $0x18] sm:$0xff]
  %v710 = vld [vmem:[%s3 + $0x20] sm:$0xff]
  %v711 = vld [vmem:[%s3 + $0x28] sm:$0xff]
  %v712 = vld [vmem:[%s3 + $0x30] sm:$0xff]
  %v713 = vld [vmem:[%s3 + $0x38] sm:$0xff]
  %v715 = vsel %vm476, %v706, 0
  %v718 = vsel %vm476, %v707, 0
  %v721 = vsel %vm476, %v708, 0
  %v724 = vsel %vm476, %v709, 0
  %v727 = vsel %vm476, %v710, 0
  %v730 = vsel %vm476, %v711, 0
  %v733 = vsel %vm476, %v712, 0
  %v736 = vsel %vm476, %v713, 0
  %738 = vmatpush.msra.mxu0 0.0
  %739 = vmatpush.msra.mxu0 0.0
  %740 = vmatpush.msra.mxu0 0.0
  %741 = vmatpush.msra.mxu0 0.0
  %742 = vmatpush.msra.mxu0 0.0
  %743 = vmatpush.msra.mxu0 0.0
  %744 = vmatpush.msra.mxu0 0.0
  %745 = vmatpush.msra.mxu0 0.0
  %746 = vmatpush.msra.mxu0 0.0
  %747 = vmatpush.msra.mxu0 0.0
  %748 = vmatpush.msra.mxu0 0.0
  %749 = vmatpush.msra.mxu0 0.0
  %750 = vmatpush.msra.mxu0 0.0
  %751 = vmatpush.msra.mxu0 0.0
  %752 = vmatpush.msra.mxu0 %v705
  %753 = vmatpush.msra.mxu0 %v704
  %754 = vmatmul.f32.gmra.mxu0 %v715
  %v755 = vpop.f32.mrf.mxu0
  %v756 = vadd.f32 0.0, %v755
  %757 = vmatmul.f32.gmra.mxu0 %v718
  %v758 = vpop.f32.mrf.mxu0
  %v759 = vadd.f32 0.0, %v758
  %760 = vmatmul.f32.gmra.mxu0 %v721
  %v761 = vpop.f32.mrf.mxu0
  %v762 = vadd.f32 0.0, %v761
  %763 = vmatmul.f32.gmra.mxu0 %v724
  %v764 = vpop.f32.mrf.mxu0
  %v765 = vadd.f32 0.0, %v764
  %766 = vmatmul.f32.gmra.mxu0 %v727
  %v767 = vpop.f32.mrf.mxu0
  %v768 = vadd.f32 0.0, %v767
  %769 = vmatmul.f32.gmra.mxu0 %v730
  %v770 = vpop.f32.mrf.mxu0
  %v771 = vadd.f32 0.0, %v770
  %772 = vmatmul.f32.gmra.mxu0 %v733
  %v773 = vpop.f32.mrf.mxu0
  %v774 = vadd.f32 0.0, %v773
  %775 = vmatmul.f32.gmra.mxu0 %v736
  %v776 = vpop.f32.mrf.mxu0
  %v777 = vadd.f32 0.0, %v776
  %778 = vdwg.mxu0
  %v779 = vld [vmem:[%s6 + $0x40] sm:$0xff]
  %v780 = vld [vmem:[%s6 + $0x48] sm:$0xff]
  %v781 = vld [vmem:[%s6 + $0x50] sm:$0xff]
  %v782 = vld [vmem:[%s6 + $0x58] sm:$0xff]
  %v783 = vld [vmem:[%s6 + $0x60] sm:$0xff]
  %v784 = vld [vmem:[%s6 + $0x68] sm:$0xff]
  %v785 = vld [vmem:[%s6 + $0x70] sm:$0xff]
  %v786 = vld [vmem:[%s6 + $0x78] sm:$0xff]
  %787 = vadd.xlane.f32.xlu0 %v756
  %v788 = vpop.xlane.xlu0 %787
  %789 = vadd.xlane.f32.xlu0 %v759
  %v790 = vpop.xlane.xlu0 %789
  %791 = vadd.xlane.f32.xlu0 %v762
  %v792 = vpop.xlane.xlu0 %791
  %793 = vadd.xlane.f32.xlu0 %v765
  %v794 = vpop.xlane.xlu0 %793
  %795 = vadd.xlane.f32.xlu0 %v768
  %v796 = vpop.xlane.xlu0 %795
  %797 = vadd.xlane.f32.xlu0 %v771
  %v798 = vpop.xlane.xlu0 %797
  %799 = vadd.xlane.f32.xlu0 %v774
  %v800 = vpop.xlane.xlu0 %799
  %801 = vadd.xlane.f32.xlu0 %v777
  %v802 = vpop.xlane.xlu0 %801
  %v803 = vmul.f32 %v788, %v91
  %v804 = vmul.f32 %v790, %v91
  %v805 = vmul.f32 %v792, %v91
  %v806 = vmul.f32 %v794, %v91
  %v807 = vmul.f32 %v796, %v91
  %v808 = vmul.f32 %v798, %v91
  %v809 = vmul.f32 %v800, %v91
  %v810 = vmul.f32 %v802, %v91
  %v811 = vsub.f32 %v756, %v803
  %v812 = vsub.f32 %v759, %v804
  %v813 = vsub.f32 %v762, %v805
  %v814 = vsub.f32 %v765, %v806
  %v815 = vsub.f32 %v768, %v807
  %v816 = vsub.f32 %v771, %v808
  %v817 = vsub.f32 %v774, %v809
  %v818 = vsub.f32 %v777, %v810
  %v819 = vmul.f32 %v811, %v811
  %v820 = vmul.f32 %v812, %v812
  %v821 = vmul.f32 %v813, %v813
  %v822 = vmul.f32 %v814, %v814
  %v823 = vmul.f32 %v815, %v815
  %v824 = vmul.f32 %v816, %v816
  %v825 = vmul.f32 %v817, %v817
  %v826 = vmul.f32 %v818, %v818
  %827 = vadd.xlane.f32.xlu0 %v819
  %v828 = vpop.xlane.xlu0 %827
  %829 = vadd.xlane.f32.xlu0 %v820
  %v830 = vpop.xlane.xlu0 %829
  %831 = vadd.xlane.f32.xlu0 %v821
  %v832 = vpop.xlane.xlu0 %831
  %833 = vadd.xlane.f32.xlu0 %v822
  %v834 = vpop.xlane.xlu0 %833
  %835 = vadd.xlane.f32.xlu0 %v823
  %v836 = vpop.xlane.xlu0 %835
  %837 = vadd.xlane.f32.xlu0 %v824
  %v838 = vpop.xlane.xlu0 %837
  %839 = vadd.xlane.f32.xlu0 %v825
  %v840 = vpop.xlane.xlu0 %839
  %841 = vadd.xlane.f32.xlu0 %v826
  %v842 = vpop.xlane.xlu0 %841
  %v843 = vmul.f32 %v828, %v91
  %v844 = vmul.f32 %v830, %v91
  %v845 = vmul.f32 %v832, %v91
  %v846 = vmul.f32 %v834, %v91
  %v847 = vmul.f32 %v836, %v91
  %v848 = vmul.f32 %v838, %v91
  %v849 = vmul.f32 %v840, %v91
  %v850 = vmul.f32 %v842, %v91
  %v851 = vadd.f32 %v843, 1e-05
  %v852 = vadd.f32 %v844, 1e-05
  %v853 = vadd.f32 %v845, 1e-05
  %v854 = vadd.f32 %v846, 1e-05
  %v855 = vadd.f32 %v847, 1e-05
  %v856 = vadd.f32 %v848, 1e-05
  %v857 = vadd.f32 %v849, 1e-05
  %v858 = vadd.f32 %v850, 1e-05
  %v859 = vrsqrt.pop %v851
  %v860 = vmul.f32 %v859, %v851
  %v861 = vmul.f32 %v860, %v859
  %v862 = vmul.f32 0.5, %v861
  %v863 = vsub.f32 1.5, %v862
  %v864 = vmul.f32 %v859, %v863
  %vm865 = vweird.f32 %v851
  %vm866 = vweird.f32 %v859
  %vm867 = vmor %vm865, %vm866
  %v868 = vsel %vm867, %v859, %v864
  %v869 = vrsqrt.pop %v852
  %v870 = vmul.f32 %v869, %v852
  %v871 = vmul.f32 %v870, %v869
  %v872 = vmul.f32 0.5, %v871
  %v873 = vsub.f32 1.5, %v872
  %v874 = vmul.f32 %v869, %v873
  %vm875 = vweird.f32 %v852
  %vm876 = vweird.f32 %v869
  %vm877 = vmor %vm875, %vm876
  %v878 = vsel %vm877, %v869, %v874
  %v879 = vrsqrt.pop %v853
  %v880 = vmul.f32 %v879, %v853
  %v881 = vmul.f32 %v880, %v879
  %v882 = vmul.f32 0.5, %v881
  %v883 = vsub.f32 1.5, %v882
  %v884 = vmul.f32 %v879, %v883
  %vm885 = vweird.f32 %v853
  %vm886 = vweird.f32 %v879
  %vm887 = vmor %vm885, %vm886
  %v888 = vsel %vm887, %v879, %v884
  %v889 = vrsqrt.pop %v854
  %v890 = vmul.f32 %v889, %v854
  %v891 = vmul.f32 %v890, %v889
  %v892 = vmul.f32 0.5, %v891
  %v893 = vsub.f32 1.5, %v892
  %v894 = vmul.f32 %v889, %v893
  %vm895 = vweird.f32 %v854
  %vm896 = vweird.f32 %v889
  %vm897 = vmor %vm895, %vm896
  %v898 = vsel %vm897, %v889, %v894
  %v899 = vrsqrt.pop %v855
  %v900 = vmul.f32 %v899, %v855
  %v901 = vmul.f32 %v900, %v899
  %v902 = vmul.f32 0.5, %v901
  %v903 = vsub.f32 1.5, %v902
  %v904 = vmul.f32 %v899, %v903
  %vm905 = vweird.f32 %v855
  %vm906 = vweird.f32 %v899
  %vm907 = vmor %vm905, %vm906
  %v908 = vsel %vm907, %v899, %v904
  %v909 = vrsqrt.pop %v856
  %v910 = vmul.f32 %v909, %v856
  %v911 = vmul.f32 %v910, %v909
  %v912 = vmul.f32 0.5, %v911
  %v913 = vsub.f32 1.5, %v912
  %v914 = vmul.f32 %v909, %v913
  %vm915 = vweird.f32 %v856
  %vm916 = vweird.f32 %v909
  %vm917 = vmor %vm915, %vm916
  %v918 = vsel %vm917, %v909, %v914
  %v919 = vrsqrt.pop %v857
  %v920 = vmul.f32 %v919, %v857
  %v921 = vmul.f32 %v920, %v919
  %v922 = vmul.f32 0.5, %v921
  %v923 = vsub.f32 1.5, %v922
  %v924 = vmul.f32 %v919, %v923
  %vm925 = vweird.f32 %v857
  %vm926 = vweird.f32 %v919
  %vm927 = vmor %vm925, %vm926
  %v928 = vsel %vm927, %v919, %v924
  %v929 = vrsqrt.pop %v858
  %v930 = vmul.f32 %v929, %v858
  %v931 = vmul.f32 %v930, %v929
  %v932 = vmul.f32 0.5, %v931
  %v933 = vsub.f32 1.5, %v932
  %v934 = vmul.f32 %v929, %v933
  %vm935 = vweird.f32 %v858
  %vm936 = vweird.f32 %v929
  %vm937 = vmor %vm935, %vm936
  %v938 = vsel %vm937, %v929, %v934
  %v939 = vmul.f32 %v779, %v868
  %v940 = vmul.f32 %v780, %v878
  %v941 = vmul.f32 %v781, %v888
  %v942 = vmul.f32 %v782, %v898
  %v943 = vmul.f32 %v783, %v908
  %v944 = vmul.f32 %v784, %v918
  %v945 = vmul.f32 %v785, %v928
  %v946 = vmul.f32 %v786, %v938
  %948 = vset.pattern.permute.xlu0 0
  %949 = vperm.xlu0 %948, %v939
  %v950 = vpop.permute.xlu0 %949
  %953 = vset.pattern.permute.xlu0 0
  %954 = vperm.xlu0 %953, %v940
  %v955 = vpop.permute.xlu0 %954
  %958 = vset.pattern.permute.xlu0 0
  %959 = vperm.xlu0 %958, %v941
  %v960 = vpop.permute.xlu0 %959
  %963 = vset.pattern.permute.xlu0 0
  %964 = vperm.xlu0 %963, %v942
  %v965 = vpop.permute.xlu0 %964
  %968 = vset.pattern.permute.xlu0 0
  %969 = vperm.xlu0 %968, %v943
  %v970 = vpop.permute.xlu0 %969
  %973 = vset.pattern.permute.xlu0 0
  %974 = vperm.xlu0 %973, %v944
  %v975 = vpop.permute.xlu0 %974
  %978 = vset.pattern.permute.xlu0 0
  %979 = vperm.xlu0 %978, %v945
  %v980 = vpop.permute.xlu0 %979
  %983 = vset.pattern.permute.xlu0 0
  %984 = vperm.xlu0 %983, %v946
  %v985 = vpop.permute.xlu0 %984
  %v987 = vmul.f32 %v811, %v950
  %v988 = vmul.f32 %v812, %v955
  %v989 = vmul.f32 %v813, %v960
  %v990 = vmul.f32 %v814, %v965
  %v991 = vmul.f32 %v815, %v970
  %v992 = vmul.f32 %v816, %v975
  %v993 = vmul.f32 %v817, %v980
  %v994 = vmul.f32 %v818, %v985
  %996 = vset.pattern.permute.xlu0 1
  %997 = vperm.xlu0 %996, %v779
  %v998 = vpop.permute.xlu0 %997
  %1001 = vset.pattern.permute.xlu0 1
  %1002 = vperm.xlu0 %1001, %v780
  %v1003 = vpop.permute.xlu0 %1002
  %1006 = vset.pattern.permute.xlu0 1
  %1007 = vperm.xlu0 %1006, %v781
  %v1008 = vpop.permute.xlu0 %1007
  %1011 = vset.pattern.permute.xlu0 1
  %1012 = vperm.xlu0 %1011, %v782
  %v1013 = vpop.permute.xlu0 %1012
  %1016 = vset.pattern.permute.xlu0 1
  %1017 = vperm.xlu0 %1016, %v783
  %v1018 = vpop.permute.xlu0 %1017
  %1021 = vset.pattern.permute.xlu0 1
  %1022 = vperm.xlu0 %1021, %v784
  %v1023 = vpop.permute.xlu0 %1022
  %1026 = vset.pattern.permute.xlu0 1
  %1027 = vperm.xlu0 %1026, %v785
  %v1028 = vpop.permute.xlu0 %1027
  %1031 = vset.pattern.permute.xlu0 1
  %1032 = vperm.xlu0 %1031, %v786
  %v1033 = vpop.permute.xlu0 %1032
  %v1035 = vadd.f32 %v987, %v998
  %v1036 = vadd.f32 %v988, %v1003
  %v1037 = vadd.f32 %v989, %v1008
  %v1038 = vadd.f32 %v990, %v1013
  %v1039 = vadd.f32 %v991, %v1018
  %v1040 = vadd.f32 %v992, %v1023
  %v1041 = vadd.f32 %v993, %v1028
  %v1042 = vadd.f32 %v994, %v1033
  %v1043 = vmul.f32 %v1035, 0.2
  %v1044 = vmul.f32 %v1036, 0.2
  %v1045 = vmul.f32 %v1037, 0.2
  %v1046 = vmul.f32 %v1038, 0.2
  %v1047 = vmul.f32 %v1039, 0.2
  %v1048 = vmul.f32 %v1040, 0.2
  %v1049 = vmul.f32 %v1041, 0.2
  %v1050 = vmul.f32 %v1042, 0.2
  %v1051 = vmax.f32 %v1035, %v1043
  %v1052 = vmax.f32 %v1036, %v1044
  %v1053 = vmax.f32 %v1037, %v1045
  %v1054 = vmax.f32 %v1038, %v1046
  %v1055 = vmax.f32 %v1039, %v1047
  %v1056 = vmax.f32 %v1040, %v1048
  %v1057 = vmax.f32 %v1041, %v1049
  %v1058 = vmax.f32 %v1042, %v1050
  %1059 = vrot.lane.b32.xlu0 %v1055, 2
  %v1060 = vpop.permute.xlu0 %1059
  %1061 = vrot.lane.b32.xlu0 %v1056, 2
  %v1062 = vpop.permute.xlu0 %1061
  %1063 = vrot.lane.b32.xlu0 %v1057, 2
  %v1064 = vpop.permute.xlu0 %1063
  %1065 = vrot.lane.b32.xlu0 %v1058, 2
  %v1066 = vpop.permute.xlu0 %1065
  %1067 = vrot.lane.b32.xlu0 %v1055, 4
  %v1068 = vpop.permute.xlu0 %1067
  %1069 = vrot.lane.b32.xlu0 %v1056, 4
  %v1070 = vpop.permute.xlu0 %1069
  %1071 = vrot.lane.b32.xlu0 %v1057, 4
  %v1072 = vpop.permute.xlu0 %1071
  %1073 = vrot.lane.b32.xlu0 %v1058, 4
  %v1074 = vpop.permute.xlu0 %1073
  %v1075 = vmax.f32 %v1060, %v1068
  %v1076 = vmax.f32 %v1062, %v1070
  %v1077 = vmax.f32 %v1064, %v1072
  %v1078 = vmax.f32 %v1066, %v1074
  %1079 = vrot.lane.b32.xlu0 %v1055, 6
  %v1080 = vpop.permute.xlu0 %1079
  %1081 = vrot.lane.b32.xlu0 %v1056, 6
  %v1082 = vpop.permute.xlu0 %1081
  %1083 = vrot.lane.b32.xlu0 %v1057, 6
  %v1084 = vpop.permute.xlu0 %1083
  %1085 = vrot.lane.b32.xlu0 %v1058, 6
  %v1086 = vpop.permute.xlu0 %1085
  %v1087 = vmax.f32 %v1075, %v1080
  %v1088 = vmax.f32 %v1076, %v1082
  %v1089 = vmax.f32 %v1077, %v1084
  %v1090 = vmax.f32 %v1078, %v1086
  %1091 = vrot.lane.b32.xlu0 %v1055, 8
  %v1092 = vpop.permute.xlu0 %1091
  %1093 = vrot.lane.b32.xlu0 %v1056, 8
  %v1094 = vpop.permute.xlu0 %1093
  %1095 = vrot.lane.b32.xlu0 %v1057, 8
  %v1096 = vpop.permute.xlu0 %1095
  %1097 = vrot.lane.b32.xlu0 %v1058, 8
  %v1098 = vpop.permute.xlu0 %1097
  %v1099 = vmax.f32 %v1087, %v1092
  %v1100 = vmax.f32 %v1088, %v1094
  %v1101 = vmax.f32 %v1089, %v1096
  %v1102 = vmax.f32 %v1090, %v1098
  %1103 = vrot.lane.b32.xlu0 %v1055, 126
  %v1104 = vpop.permute.xlu0 %1103
  %1105 = vrot.lane.b32.xlu0 %v1056, 126
  %v1106 = vpop.permute.xlu0 %1105
  %1107 = vrot.lane.b32.xlu0 %v1057, 126
  %v1108 = vpop.permute.xlu0 %1107
  %1109 = vrot.lane.b32.xlu0 %v1058, 126
  %v1110 = vpop.permute.xlu0 %1109
  %v1111 = vmax.f32 %v1099, %v1104
  %v1112 = vmax.f32 %v1100, %v1106
  %v1113 = vmax.f32 %v1101, %v1108
  %v1114 = vmax.f32 %v1102, %v1110
  %1115 = vrot.lane.b32.xlu0 %v1055, 124
  %v1116 = vpop.permute.xlu0 %1115
  %1117 = vrot.lane.b32.xlu0 %v1056, 124
  %v1118 = vpop.permute.xlu0 %1117
  %1119 = vrot.lane.b32.xlu0 %v1057, 124
  %v1120 = vpop.permute.xlu0 %1119
  %1121 = vrot.lane.b32.xlu0 %v1058, 124
  %v1122 = vpop.permute.xlu0 %1121
  %v1123 = vmax.f32 %v1111, %v1116
  %v1124 = vmax.f32 %v1112, %v1118
  %v1125 = vmax.f32 %v1113, %v1120
  %v1126 = vmax.f32 %v1114, %v1122
  %1127 = vrot.lane.b32.xlu0 %v1055, 122
  %v1128 = vpop.permute.xlu0 %1127
  %1129 = vrot.lane.b32.xlu0 %v1056, 122
  %v1130 = vpop.permute.xlu0 %1129
  %1131 = vrot.lane.b32.xlu0 %v1057, 122
  %v1132 = vpop.permute.xlu0 %1131
  %1133 = vrot.lane.b32.xlu0 %v1058, 122
  %v1134 = vpop.permute.xlu0 %1133
  %v1135 = vmax.f32 %v1123, %v1128
  %v1136 = vmax.f32 %v1124, %v1130
  %v1137 = vmax.f32 %v1125, %v1132
  %v1138 = vmax.f32 %v1126, %v1134
  %1139 = vrot.lane.b32.xlu0 %v1055, 120
  %v1140 = vpop.permute.xlu0 %1139
  %1141 = vrot.lane.b32.xlu0 %v1056, 120
  %v1142 = vpop.permute.xlu0 %1141
  %1143 = vrot.lane.b32.xlu0 %v1057, 120
  %v1144 = vpop.permute.xlu0 %1143
  %1145 = vrot.lane.b32.xlu0 %v1058, 120
  %v1146 = vpop.permute.xlu0 %1145
  %v1147 = vmax.f32 %v1135, %v1140
  %v1148 = vmax.f32 %v1136, %v1142
  %v1149 = vmax.f32 %v1137, %v1144
  %v1150 = vmax.f32 %v1138, %v1146
  %v1151 = vadd.f32 %v1051, %v1147
  %v1152 = vadd.f32 %v1052, %v1148
  %v1153 = vadd.f32 %v1053, %v1149
  %v1154 = vadd.f32 %v1054, %v1150
  %v1155 = vld [vmem:[%s4] sm:$0xff]
  %v1156 = vld [vmem:[%s4 + $0x8] sm:$0xff]
  %v1157 = vld [vmem:[%s4 + $0x10] sm:$0xff]
  %v1158 = vld [vmem:[%s4 + $0x18] sm:$0xff]
  %v1159 = vld [vmem:[%s4 + $0x20] sm:$0xff]
  %v1160 = vld [vmem:[%s4 + $0x28] sm:$0xff]
  %v1161 = vld [vmem:[%s4 + $0x30] sm:$0xff]
  %v1162 = vld [vmem:[%s4 + $0x38] sm:$0xff]
  %vm1163 = vcmask 261120
  %v1165 = vsel %vm1163, %v1155, 0
  %v1168 = vsel %vm1163, %v1156, 0
  %v1171 = vsel %vm1163, %v1157, 0
  %v1174 = vsel %vm1163, %v1158, 0
  %v1177 = vsel %vm1163, %v1159, 0
  %v1180 = vsel %vm1163, %v1160, 0
  %v1183 = vsel %vm1163, %v1161, 0
  %v1186 = vsel %vm1163, %v1162, 0
  %1188 = vmatpush.msra.mxu0 0.0
  %1189 = vmatpush.msra.mxu0 0.0
  %1190 = vmatpush.msra.mxu0 0.0
  %1191 = vmatpush.msra.mxu0 0.0
  %1192 = vmatpush.msra.mxu0 0.0
  %1193 = vmatpush.msra.mxu0 0.0
  %1194 = vmatpush.msra.mxu0 0.0
  %1195 = vmatpush.msra.mxu0 0.0
  %1196 = vmatpush.msra.mxu0 0.0
  %1197 = vmatpush.msra.mxu0 0.0
  %1198 = vmatpush.msra.mxu0 0.0
  %1199 = vmatpush.msra.mxu0 0.0
  %1200 = vmatpush.msra.mxu0 %v1154
  %1201 = vmatpush.msra.mxu0 %v1153
  %1202 = vmatpush.msra.mxu0 %v1152
  %1203 = vmatpush.msra.mxu0 %v1151
  %1204 = vmatmul.f32.gmra.mxu0 %v1165
  %v1205 = vpop.f32.mrf.mxu0
  %v1206 = vadd.f32 0.0, %v1205
  %1207 = vmatmul.f32.gmra.mxu0 %v1168
  %v1208 = vpop.f32.mrf.mxu0
  %v1209 = vadd.f32 0.0, %v1208
  %1210 = vmatmul.f32.gmra.mxu0 %v1171
  %v1211 = vpop.f32.mrf.mxu0
  %v1212 = vadd.f32 0.0, %v1211
  %1213 = vmatmul.f32.gmra.mxu0 %v1174
  %v1214 = vpop.f32.mrf.mxu0
  %v1215 = vadd.f32 0.0, %v1214
  %1216 = vmatmul.f32.gmra.mxu0 %v1177
  %v1217 = vpop.f32.mrf.mxu0
  %v1218 = vadd.f32 0.0, %v1217
  %1219 = vmatmul.f32.gmra.mxu0 %v1180
  %v1220 = vpop.f32.mrf.mxu0
  %v1221 = vadd.f32 0.0, %v1220
  %1222 = vmatmul.f32.gmra.mxu0 %v1183
  %v1223 = vpop.f32.mrf.mxu0
  %v1224 = vadd.f32 0.0, %v1223
  %1225 = vmatmul.f32.gmra.mxu0 %v1186
  %v1226 = vpop.f32.mrf.mxu0
  %v1227 = vadd.f32 0.0, %v1226
  %1228 = vdwg.mxu0
  %v1229 = vld [vmem:[%s6 + $0x80] sm:$0xff]
  %v1230 = vld [vmem:[%s6 + $0x88] sm:$0xff]
  %v1231 = vld [vmem:[%s6 + $0x90] sm:$0xff]
  %v1232 = vld [vmem:[%s6 + $0x98] sm:$0xff]
  %v1233 = vld [vmem:[%s6 + $0xa0] sm:$0xff]
  %v1234 = vld [vmem:[%s6 + $0xa8] sm:$0xff]
  %v1235 = vld [vmem:[%s6 + $0xb0] sm:$0xff]
  %v1236 = vld [vmem:[%s6 + $0xb8] sm:$0xff]
  %1237 = vadd.xlane.f32.xlu0 %v1206
  %v1238 = vpop.xlane.xlu0 %1237
  %1239 = vadd.xlane.f32.xlu0 %v1209
  %v1240 = vpop.xlane.xlu0 %1239
  %1241 = vadd.xlane.f32.xlu0 %v1212
  %v1242 = vpop.xlane.xlu0 %1241
  %1243 = vadd.xlane.f32.xlu0 %v1215
  %v1244 = vpop.xlane.xlu0 %1243
  %1245 = vadd.xlane.f32.xlu0 %v1218
  %v1246 = vpop.xlane.xlu0 %1245
  %1247 = vadd.xlane.f32.xlu0 %v1221
  %v1248 = vpop.xlane.xlu0 %1247
  %1249 = vadd.xlane.f32.xlu0 %v1224
  %v1250 = vpop.xlane.xlu0 %1249
  %1251 = vadd.xlane.f32.xlu0 %v1227
  %v1252 = vpop.xlane.xlu0 %1251
  %v1253 = vmul.f32 %v1238, %v91
  %v1254 = vmul.f32 %v1240, %v91
  %v1255 = vmul.f32 %v1242, %v91
  %v1256 = vmul.f32 %v1244, %v91
  %v1257 = vmul.f32 %v1246, %v91
  %v1258 = vmul.f32 %v1248, %v91
  %v1259 = vmul.f32 %v1250, %v91
  %v1260 = vmul.f32 %v1252, %v91
  %v1261 = vsub.f32 %v1206, %v1253
  %v1262 = vsub.f32 %v1209, %v1254
  %v1263 = vsub.f32 %v1212, %v1255
  %v1264 = vsub.f32 %v1215, %v1256
  %v1265 = vsub.f32 %v1218, %v1257
  %v1266 = vsub.f32 %v1221, %v1258
  %v1267 = vsub.f32 %v1224, %v1259
  %v1268 = vsub.f32 %v1227, %v1260
  %v1269 = vmul.f32 %v1261, %v1261
  %v1270 = vmul.f32 %v1262, %v1262
  %v1271 = vmul.f32 %v1263, %v1263
  %v1272 = vmul.f32 %v1264, %v1264
  %v1273 = vmul.f32 %v1265, %v1265
  %v1274 = vmul.f32 %v1266, %v1266
  %v1275 = vmul.f32 %v1267, %v1267
  %v1276 = vmul.f32 %v1268, %v1268
  %1277 = vadd.xlane.f32.xlu0 %v1269
  %v1278 = vpop.xlane.xlu0 %1277
  %1279 = vadd.xlane.f32.xlu0 %v1270
  %v1280 = vpop.xlane.xlu0 %1279
  %1281 = vadd.xlane.f32.xlu0 %v1271
  %v1282 = vpop.xlane.xlu0 %1281
  %1283 = vadd.xlane.f32.xlu0 %v1272
  %v1284 = vpop.xlane.xlu0 %1283
  %1285 = vadd.xlane.f32.xlu0 %v1273
  %v1286 = vpop.xlane.xlu0 %1285
  %1287 = vadd.xlane.f32.xlu0 %v1274
  %v1288 = vpop.xlane.xlu0 %1287
  %1289 = vadd.xlane.f32.xlu0 %v1275
  %v1290 = vpop.xlane.xlu0 %1289
  %1291 = vadd.xlane.f32.xlu0 %v1276
  %v1292 = vpop.xlane.xlu0 %1291
  %v1293 = vmul.f32 %v1278, %v91
  %v1294 = vmul.f32 %v1280, %v91
  %v1295 = vmul.f32 %v1282, %v91
  %v1296 = vmul.f32 %v1284, %v91
  %v1297 = vmul.f32 %v1286, %v91
  %v1298 = vmul.f32 %v1288, %v91
  %v1299 = vmul.f32 %v1290, %v91
  %v1300 = vmul.f32 %v1292, %v91
  %v1301 = vadd.f32 %v1293, 1e-05
  %v1302 = vadd.f32 %v1294, 1e-05
  %v1303 = vadd.f32 %v1295, 1e-05
  %v1304 = vadd.f32 %v1296, 1e-05
  %v1305 = vadd.f32 %v1297, 1e-05
  %v1306 = vadd.f32 %v1298, 1e-05
  %v1307 = vadd.f32 %v1299, 1e-05
  %v1308 = vadd.f32 %v1300, 1e-05
  %v1309 = vrsqrt.pop %v1301
  %v1310 = vmul.f32 %v1309, %v1301
  %v1311 = vmul.f32 %v1310, %v1309
  %v1312 = vmul.f32 0.5, %v1311
  %v1313 = vsub.f32 1.5, %v1312
  %v1314 = vmul.f32 %v1309, %v1313
  %vm1315 = vweird.f32 %v1301
  %vm1316 = vweird.f32 %v1309
  %vm1317 = vmor %vm1315, %vm1316
  %v1318 = vsel %vm1317, %v1309, %v1314
  %v1319 = vrsqrt.pop %v1302
  %v1320 = vmul.f32 %v1319, %v1302
  %v1321 = vmul.f32 %v1320, %v1319
  %v1322 = vmul.f32 0.5, %v1321
  %v1323 = vsub.f32 1.5, %v1322
  %v1324 = vmul.f32 %v1319, %v1323
  %vm1325 = vweird.f32 %v1302
  %vm1326 = vweird.f32 %v1319
  %vm1327 = vmor %vm1325, %vm1326
  %v1328 = vsel %vm1327, %v1319, %v1324
  %v1329 = vrsqrt.pop %v1303
  %v1330 = vmul.f32 %v1329, %v1303
  %v1331 = vmul.f32 %v1330, %v1329
  %v1332 = vmul.f32 0.5, %v1331
  %v1333 = vsub.f32 1.5, %v1332
  %v1334 = vmul.f32 %v1329, %v1333
  %vm1335 = vweird.f32 %v1303
  %vm1336 = vweird.f32 %v1329
  %vm1337 = vmor %vm1335, %vm1336
  %v1338 = vsel %vm1337, %v1329, %v1334
  %v1339 = vrsqrt.pop %v1304
  %v1340 = vmul.f32 %v1339, %v1304
  %v1341 = vmul.f32 %v1340, %v1339
  %v1342 = vmul.f32 0.5, %v1341
  %v1343 = vsub.f32 1.5, %v1342
  %v1344 = vmul.f32 %v1339, %v1343
  %vm1345 = vweird.f32 %v1304
  %vm1346 = vweird.f32 %v1339
  %vm1347 = vmor %vm1345, %vm1346
  %v1348 = vsel %vm1347, %v1339, %v1344
  %v1349 = vrsqrt.pop %v1305
  %v1350 = vmul.f32 %v1349, %v1305
  %v1351 = vmul.f32 %v1350, %v1349
  %v1352 = vmul.f32 0.5, %v1351
  %v1353 = vsub.f32 1.5, %v1352
  %v1354 = vmul.f32 %v1349, %v1353
  %vm1355 = vweird.f32 %v1305
  %vm1356 = vweird.f32 %v1349
  %vm1357 = vmor %vm1355, %vm1356
  %v1358 = vsel %vm1357, %v1349, %v1354
  %v1359 = vrsqrt.pop %v1306
  %v1360 = vmul.f32 %v1359, %v1306
  %v1361 = vmul.f32 %v1360, %v1359
  %v1362 = vmul.f32 0.5, %v1361
  %v1363 = vsub.f32 1.5, %v1362
  %v1364 = vmul.f32 %v1359, %v1363
  %vm1365 = vweird.f32 %v1306
  %vm1366 = vweird.f32 %v1359
  %vm1367 = vmor %vm1365, %vm1366
  %v1368 = vsel %vm1367, %v1359, %v1364
  %v1369 = vrsqrt.pop %v1307
  %v1370 = vmul.f32 %v1369, %v1307
  %v1371 = vmul.f32 %v1370, %v1369
  %v1372 = vmul.f32 0.5, %v1371
  %v1373 = vsub.f32 1.5, %v1372
  %v1374 = vmul.f32 %v1369, %v1373
  %vm1375 = vweird.f32 %v1307
  %vm1376 = vweird.f32 %v1369
  %vm1377 = vmor %vm1375, %vm1376
  %v1378 = vsel %vm1377, %v1369, %v1374
  %v1379 = vrsqrt.pop %v1308
  %v1380 = vmul.f32 %v1379, %v1308
  %v1381 = vmul.f32 %v1380, %v1379
  %v1382 = vmul.f32 0.5, %v1381
  %v1383 = vsub.f32 1.5, %v1382
  %v1384 = vmul.f32 %v1379, %v1383
  %vm1385 = vweird.f32 %v1308
  %vm1386 = vweird.f32 %v1379
  %vm1387 = vmor %vm1385, %vm1386
  %v1388 = vsel %vm1387, %v1379, %v1384
  %v1389 = vmul.f32 %v1229, %v1318
  %v1390 = vmul.f32 %v1230, %v1328
  %v1391 = vmul.f32 %v1231, %v1338
  %v1392 = vmul.f32 %v1232, %v1348
  %v1393 = vmul.f32 %v1233, %v1358
  %v1394 = vmul.f32 %v1234, %v1368
  %v1395 = vmul.f32 %v1235, %v1378
  %v1396 = vmul.f32 %v1236, %v1388
  %1398 = vset.pattern.permute.xlu0 0
  %1399 = vperm.xlu0 %1398, %v1389
  %v1400 = vpop.permute.xlu0 %1399
  %1403 = vset.pattern.permute.xlu0 0
  %1404 = vperm.xlu0 %1403, %v1390
  %v1405 = vpop.permute.xlu0 %1404
  %1408 = vset.pattern.permute.xlu0 0
  %1409 = vperm.xlu0 %1408, %v1391
  %v1410 = vpop.permute.xlu0 %1409
  %1413 = vset.pattern.permute.xlu0 0
  %1414 = vperm.xlu0 %1413, %v1392
  %v1415 = vpop.permute.xlu0 %1414
  %1418 = vset.pattern.permute.xlu0 0
  %1419 = vperm.xlu0 %1418, %v1393
  %v1420 = vpop.permute.xlu0 %1419
  %1423 = vset.pattern.permute.xlu0 0
  %1424 = vperm.xlu0 %1423, %v1394
  %v1425 = vpop.permute.xlu0 %1424
  %1428 = vset.pattern.permute.xlu0 0
  %1429 = vperm.xlu0 %1428, %v1395
  %v1430 = vpop.permute.xlu0 %1429
  %1433 = vset.pattern.permute.xlu0 0
  %1434 = vperm.xlu0 %1433, %v1396
  %v1435 = vpop.permute.xlu0 %1434
  %v1437 = vmul.f32 %v1261, %v1400
  %v1438 = vmul.f32 %v1262, %v1405
  %v1439 = vmul.f32 %v1263, %v1410
  %v1440 = vmul.f32 %v1264, %v1415
  %v1441 = vmul.f32 %v1265, %v1420
  %v1442 = vmul.f32 %v1266, %v1425
  %v1443 = vmul.f32 %v1267, %v1430
  %v1444 = vmul.f32 %v1268, %v1435
  %1446 = vset.pattern.permute.xlu0 1
  %1447 = vperm.xlu0 %1446, %v1229
  %v1448 = vpop.permute.xlu0 %1447
  %1451 = vset.pattern.permute.xlu0 1
  %1452 = vperm.xlu0 %1451, %v1230
  %v1453 = vpop.permute.xlu0 %1452
  %1456 = vset.pattern.permute.xlu0 1
  %1457 = vperm.xlu0 %1456, %v1231
  %v1458 = vpop.permute.xlu0 %1457
  %1461 = vset.pattern.permute.xlu0 1
  %1462 = vperm.xlu0 %1461, %v1232
  %v1463 = vpop.permute.xlu0 %1462
  %1466 = vset.pattern.permute.xlu0 1
  %1467 = vperm.xlu0 %1466, %v1233
  %v1468 = vpop.permute.xlu0 %1467
  %1471 = vset.pattern.permute.xlu0 1
  %1472 = vperm.xlu0 %1471, %v1234
  %v1473 = vpop.permute.xlu0 %1472
  %1476 = vset.pattern.permute.xlu0 1
  %1477 = vperm.xlu0 %1476, %v1235
  %v1478 = vpop.permute.xlu0 %1477
  %1481 = vset.pattern.permute.xlu0 1
  %1482 = vperm.xlu0 %1481, %v1236
  %v1483 = vpop.permute.xlu0 %1482
  %v1485 = vadd.f32 %v1437, %v1448
  %v1486 = vadd.f32 %v1438, %v1453
  %v1487 = vadd.f32 %v1439, %v1458
  %v1488 = vadd.f32 %v1440, %v1463
  %v1489 = vadd.f32 %v1441, %v1468
  %v1490 = vadd.f32 %v1442, %v1473
  %v1491 = vadd.f32 %v1443, %v1478
  %v1492 = vadd.f32 %v1444, %v1483
  %v1493 = vmul.f32 %v1485, 0.2
  %v1494 = vmul.f32 %v1486, 0.2
  %v1495 = vmul.f32 %v1487, 0.2
  %v1496 = vmul.f32 %v1488, 0.2
  %v1497 = vmul.f32 %v1489, 0.2
  %v1498 = vmul.f32 %v1490, 0.2
  %v1499 = vmul.f32 %v1491, 0.2
  %v1500 = vmul.f32 %v1492, 0.2
  %v1501 = vmax.f32 %v1485, %v1493
  %v1502 = vmax.f32 %v1486, %v1494
  %v1503 = vmax.f32 %v1487, %v1495
  %v1504 = vmax.f32 %v1488, %v1496
  %v1505 = vmax.f32 %v1489, %v1497
  %v1506 = vmax.f32 %v1490, %v1498
  %v1507 = vmax.f32 %v1491, %v1499
  %v1508 = vmax.f32 %v1492, %v1500
  %1509 = vrot.lane.b32.xlu0 %v1505, 2
  %v1510 = vpop.permute.xlu0 %1509
  %1511 = vrot.lane.b32.xlu0 %v1506, 2
  %v1512 = vpop.permute.xlu0 %1511
  %1513 = vrot.lane.b32.xlu0 %v1507, 2
  %v1514 = vpop.permute.xlu0 %1513
  %1515 = vrot.lane.b32.xlu0 %v1508, 2
  %v1516 = vpop.permute.xlu0 %1515
  %1517 = vrot.lane.b32.xlu0 %v1505, 4
  %v1518 = vpop.permute.xlu0 %1517
  %1519 = vrot.lane.b32.xlu0 %v1506, 4
  %v1520 = vpop.permute.xlu0 %1519
  %1521 = vrot.lane.b32.xlu0 %v1507, 4
  %v1522 = vpop.permute.xlu0 %1521
  %1523 = vrot.lane.b32.xlu0 %v1508, 4
  %v1524 = vpop.permute.xlu0 %1523
  %v1525 = vmax.f32 %v1510, %v1518
  %v1526 = vmax.f32 %v1512, %v1520
  %v1527 = vmax.f32 %v1514, %v1522
  %v1528 = vmax.f32 %v1516, %v1524
  %1529 = vrot.lane.b32.xlu0 %v1505, 6
  %v1530 = vpop.permute.xlu0 %1529
  %1531 = vrot.lane.b32.xlu0 %v1506, 6
  %v1532 = vpop.permute.xlu0 %1531
  %1533 = vrot.lane.b32.xlu0 %v1507, 6
  %v1534 = vpop.permute.xlu0 %1533
  %1535 = vrot.lane.b32.xlu0 %v1508, 6
  %v1536 = vpop.permute.xlu0 %1535
  %v1537 = vmax.f32 %v1525, %v1530
  %v1538 = vmax.f32 %v1526, %v1532
  %v1539 = vmax.f32 %v1527, %v1534
  %v1540 = vmax.f32 %v1528, %v1536
  %1541 = vrot.lane.b32.xlu0 %v1505, 8
  %v1542 = vpop.permute.xlu0 %1541
  %1543 = vrot.lane.b32.xlu0 %v1506, 8
  %v1544 = vpop.permute.xlu0 %1543
  %1545 = vrot.lane.b32.xlu0 %v1507, 8
  %v1546 = vpop.permute.xlu0 %1545
  %1547 = vrot.lane.b32.xlu0 %v1508, 8
  %v1548 = vpop.permute.xlu0 %1547
  %v1549 = vmax.f32 %v1537, %v1542
  %v1550 = vmax.f32 %v1538, %v1544
  %v1551 = vmax.f32 %v1539, %v1546
  %v1552 = vmax.f32 %v1540, %v1548
  %1553 = vrot.lane.b32.xlu0 %v1505, 126
  %v1554 = vpop.permute.xlu0 %1553
  %1555 = vrot.lane.b32.xlu0 %v1506, 126
  %v1556 = vpop.permute.xlu0 %1555
  %1557 = vrot.lane.b32.xlu0 %v1507, 126
  %v1558 = vpop.permute.xlu0 %1557
  %1559 = vrot.lane.b32.xlu0 %v1508, 126
  %v1560 = vpop.permute.xlu0 %1559
  %v1561 = vmax.f32 %v1549, %v1554
  %v1562 = vmax.f32 %v1550, %v1556
  %v1563 = vmax.f32 %v1551, %v1558
  %v1564 = vmax.f32 %v1552, %v1560
  %1565 = vrot.lane.b32.xlu0 %v1505, 124
  %v1566 = vpop.permute.xlu0 %1565
  %1567 = vrot.lane.b32.xlu0 %v1506, 124
  %v1568 = vpop.permute.xlu0 %1567
  %1569 = vrot.lane.b32.xlu0 %v1507, 124
  %v1570 = vpop.permute.xlu0 %1569
  %1571 = vrot.lane.b32.xlu0 %v1508, 124
  %v1572 = vpop.permute.xlu0 %1571
  %v1573 = vmax.f32 %v1561, %v1566
  %v1574 = vmax.f32 %v1562, %v1568
  %v1575 = vmax.f32 %v1563, %v1570
  %v1576 = vmax.f32 %v1564, %v1572
  %1577 = vrot.lane.b32.xlu0 %v1505, 122
  %v1578 = vpop.permute.xlu0 %1577
  %1579 = vrot.lane.b32.xlu0 %v1506, 122
  %v1580 = vpop.permute.xlu0 %1579
  %1581 = vrot.lane.b32.xlu0 %v1507, 122
  %v1582 = vpop.permute.xlu0 %1581
  %1583 = vrot.lane.b32.xlu0 %v1508, 122
  %v1584 = vpop.permute.xlu0 %1583
  %v1585 = vmax.f32 %v1573, %v1578
  %v1586 = vmax.f32 %v1574, %v1580
  %v1587 = vmax.f32 %v1575, %v1582
  %v1588 = vmax.f32 %v1576, %v1584
  %1589 = vrot.lane.b32.xlu0 %v1505, 120
  %v1590 = vpop.permute.xlu0 %1589
  %1591 = vrot.lane.b32.xlu0 %v1506, 120
  %v1592 = vpop.permute.xlu0 %1591
  %1593 = vrot.lane.b32.xlu0 %v1507, 120
  %v1594 = vpop.permute.xlu0 %1593
  %1595 = vrot.lane.b32.xlu0 %v1508, 120
  %v1596 = vpop.permute.xlu0 %1595
  %v1597 = vmax.f32 %v1585, %v1590
  %v1598 = vmax.f32 %v1586, %v1592
  %v1599 = vmax.f32 %v1587, %v1594
  %v1600 = vmax.f32 %v1588, %v1596
  %v1601 = vadd.f32 %v1501, %v1597
  %v1602 = vadd.f32 %v1502, %v1598
  %v1603 = vadd.f32 %v1503, %v1599
  %v1604 = vadd.f32 %v1504, %v1600
  %v1605 = vld [vmem:[%s5] sm:$0xff]
  %vm1606 = vcmask 785408
  %v1608 = vsel %vm1606, %v1605, 0
  %1610 = vmatpush.msra.mxu0 0.0
  %1611 = vmatpush.msra.mxu0 0.0
  %1612 = vmatpush.msra.mxu0 0.0
  %1613 = vmatpush.msra.mxu0 0.0
  %1614 = vmatpush.msra.mxu0 %v1604
  %1615 = vmatpush.msra.mxu0 %v1603
  %1616 = vmatpush.msra.mxu0 %v1602
  %1617 = vmatpush.msra.mxu0 %v1601
  %1618 = vmatpush.msra.mxu0 %v1154
  %1619 = vmatpush.msra.mxu0 %v1153
  %1620 = vmatpush.msra.mxu0 %v1152
  %1621 = vmatpush.msra.mxu0 %v1151
  %1622 = vmatpush.msra.mxu0 %v705
  %1623 = vmatpush.msra.mxu0 %v704
  %1624 = vmatpush.msra.mxu0 %v471
  %1625 = vmatpush.msra.mxu0 %v470
  %1626 = vmatmul.f32.gmra.mxu0 %v1608
  %v1627 = vpop.f32.mrf.mxu0
  %v1628 = vadd.f32 0.0, %v1627
  %1629 = vdwg.mxu0
  %v1630 = vld [vmem:[%s6 + $0xc0] sm:$0xff]
  %1631 = vadd.xlane.f32.xlu0 %v1628
  %v1632 = vpop.xlane.xlu0 %1631
  %v1633 = vmul.f32 %v1632, %v91
  %v1634 = vsub.f32 %v1628, %v1633
  %v1635 = vmul.f32 %v1634, %v1634
  %1636 = vadd.xlane.f32.xlu0 %v1635
  %v1637 = vpop.xlane.xlu0 %1636
  %v1638 = vmul.f32 %v1637, %v91
  %v1639 = vadd.f32 %v1638, 1e-05
  %v1640 = vrsqrt.pop %v1639
  %v1641 = vmul.f32 %v1640, %v1639
  %v1642 = vmul.f32 %v1641, %v1640
  %v1643 = vmul.f32 0.5, %v1642
  %v1644 = vsub.f32 1.5, %v1643
  %v1645 = vmul.f32 %v1640, %v1644
  %vm1646 = vweird.f32 %v1639
  %vm1647 = vweird.f32 %v1640
  %vm1648 = vmor %vm1646, %vm1647
  %v1649 = vsel %vm1648, %v1640, %v1645
  %v1650 = vmul.f32 %v1630, %v1649
  %1652 = vset.pattern.permute.xlu0 0
  %1653 = vperm.xlu0 %1652, %v1650
  %v1654 = vpop.permute.xlu0 %1653
  %v1656 = vmul.f32 %v1634, %v1654
  %1658 = vset.pattern.permute.xlu0 1
  %1659 = vperm.xlu0 %1658, %v1630
  %v1660 = vpop.permute.xlu0 %1659
  %v1662 = vadd.f32 %v1656, %v1660
  %v1663 = vmul.f32 %v1662, 0.2
  %v1664 = vmax.f32 %v1662, %v1663
  %v1665 = vld [vmem:[%s6 + $0xc8] sm:$0xff]
  %1667 = vset.pattern.permute.xlu0 0
  %1668 = vperm.xlu0 %1667, %v1665
  %v1669 = vpop.permute.xlu0 %1668
  %v1671 = vadd.f32 %v1664, %v1669
  %1672 = vst [vmem:[%s7] sm:$0xff] %v1671
  // Predicated region
  $region30: #{dgcn_forward.1} parent=0 // pred_check
    _
  $region31: #{dgcn_forward.1} parent=0 // pred_check_branch
    %1674 = sbr.rel (0) target = $region33
  $region32: #{dgcn_forward.1} parent=0 // pred_region
    _
  $region33: #{dgcn_forward.1} parent=0 // pred_fallthru
    _
  // Predicated region
  $region34: #{dgcn_forward.1} parent=0 // pred_check
    _
  $region35: #{dgcn_forward.1} parent=0 // pred_check_branch
    %1676 = sbr.rel (0) target = $region37
  $region36: #{dgcn_forward.1} parent=0 // pred_region
    _
  $region37: #{dgcn_forward.1} parent=0 // pred_fallthru
    _

</llo_original>
